<compile_context>
chip_gen: v7x
topology: tpu7x:2x2x1
jax: 0.10.0
libtpu: 0.0.40
codegen_flags: <defaults>
</compile_context>

<pallas_src>
import functools
import math

import jax
import jax.numpy as jnp
from jax.experimental import pallas as pl
from jax.experimental.pallas import tpu as pltpu


_VMEM_LIMIT = 32 * 1024 * 1024  # safe on v5e/v6e/v7x; far above what these tiles need


def _pick_tile(dim, pref, granule):
    """Largest tile <= pref (multiple of `granule`) that exactly divides `dim`;
    otherwise the full dim.  Exact division means activations never need
    padding/slicing by XLA outside the kernels."""
    if dim <= pref:
        return dim
    t = (pref // granule) * granule
    while t >= granule:
        if dim % t == 0:
            return t
        t -= granule
    return dim


# ----------------------------------------------------------------------------
# Tiled matmul kernels (bias / relu / residual fused into the K-finalize step)
# ----------------------------------------------------------------------------
def _matmul_kernel(x_ref, w_ref, b_ref, o_ref, acc_ref, *, apply_relu):
    k = pl.program_id(2)

    @pl.when(k == 0)
    def _():
        acc_ref[...] = jnp.zeros_like(acc_ref)

    acc_ref[...] += jnp.dot(
        x_ref[...].astype(jnp.bfloat16),          # in-kernel cast (VPU, free)
        w_ref[...].astype(jnp.bfloat16),          # no-op: weights stored bf16
        preferred_element_type=jnp.float32)

    @pl.when(k == pl.num_programs(2) - 1)
    def _():
        y = acc_ref[...] + b_ref[...]
        if apply_relu:
            y = jnp.maximum(y, 0.0)
        o_ref[...] = y.astype(o_ref.dtype)


def _matmul_res_kernel(x_ref, w_ref, b_ref, r_ref, o_ref, acc_ref, *, apply_relu):
    k = pl.program_id(2)

    @pl.when(k == 0)
    def _():
        acc_ref[...] = jnp.zeros_like(acc_ref)

    acc_ref[...] += jnp.dot(
        x_ref[...].astype(jnp.bfloat16),
        w_ref[...].astype(jnp.bfloat16),
        preferred_element_type=jnp.float32)

    @pl.when(k == pl.num_programs(2) - 1)
    def _():
        y = acc_ref[...] + b_ref[...]
        if apply_relu:
            y = jnp.maximum(y, 0.0)
        y = y + r_ref[...]                        # fused residual add (f32)
        o_ref[...] = y.astype(o_ref.dtype)


def linear_pallas(x2d, w, b, *, apply_relu=False, residual=None,
                  out_dtype=jnp.float32,
                  tm_pref=256, tn_pref=256, tk_pref=512):
    """y = [relu](x @ W + b) [+ residual]; tiled, pipelined, bf16 MXU inputs,
    f32 VMEM accumulator.  No activation padding: tiles exactly divide dims."""
    M, K = x2d.shape
    Kw, N = w.shape
    assert Kw == K

    tm = _pick_tile(M, tm_pref, 16)    # 16: bf16 packs two rows per sublane
    tn = _pick_tile(N, tn_pref, 128)   # lane-dense output columns when tiled
    tk = _pick_tile(K, tk_pref, 128)

    b2 = b.astype(jnp.float32).reshape(1, N)

    in_specs = [
        pl.BlockSpec((tm, tk), lambda i, j, k: (i, k)),
        pl.BlockSpec((tk, tn), lambda i, j, k: (k, j)),
        pl.BlockSpec((1, tn), lambda i, j, k: (0, j)),
    ]
    args = [x2d, w, b2]
    if residual is not None:
        in_specs.append(pl.BlockSpec((tm, tn), lambda i, j, k: (i, j)))
        args.append(residual)
        kernel = functools.partial(_matmul_res_kernel, apply_relu=apply_relu)
    else:
        kernel = functools.partial(_matmul_kernel, apply_relu=apply_relu)

    return pl.pallas_call(
        kernel,
        out_shape=jax.ShapeDtypeStruct((M, N), out_dtype),
        grid=(M // tm, N // tn, K // tk),
        in_specs=in_specs,
        out_specs=pl.BlockSpec((tm, tn), lambda i, j, k: (i, j)),
        scratch_shapes=[pltpu.VMEM((tm, tn), jnp.float32)],
        compiler_params=pltpu.CompilerParams(
            dimension_semantics=("parallel", "parallel", "arbitrary"),
            vmem_limit_bytes=_VMEM_LIMIT,
        ),
    )(*args)


# ----------------------------------------------------------------------------
# Norm kernel (row-tiled; matches torch.std's unbiased variance; emits bf16)
# ----------------------------------------------------------------------------
def _norm_kernel(x_ref, a_ref, b_ref, o_ref, *, d):
    x = x_ref[...]
    mean = jnp.mean(x, axis=-1, keepdims=True)
    xc = x - mean
    var = jnp.sum(xc * xc, axis=-1, keepdims=True) * (1.0 / (d - 1))
    inv = pl.reciprocal(jnp.sqrt(var) + 1e-6, approx=True)   # EUP slot, not VALU divide
    o_ref[...] = (a_ref[...] * xc * inv + b_ref[...]).astype(o_ref.dtype)


def norm_pallas(x2d, alpha, bias, *, out_dtype=jnp.bfloat16):
    M, D = x2d.shape
    tm = _pick_tile(M, 512, 8)
    return pl.pallas_call(
        functools.partial(_norm_kernel, d=D),
        out_shape=jax.ShapeDtypeStruct((M, D), out_dtype),
        grid=(M // tm,),
        in_specs=[
            pl.BlockSpec((tm, D), lambda i: (i, 0)),
            pl.BlockSpec((1, D), lambda i: (0, 0)),
            pl.BlockSpec((1, D), lambda i: (0, 0)),
        ],
        out_specs=pl.BlockSpec((tm, D), lambda i: (i, 0)),
        compiler_params=pltpu.CompilerParams(
            dimension_semantics=("parallel",),
            vmem_limit_bytes=_VMEM_LIMIT,
        ),
    )(x2d, alpha.reshape(1, D), bias.reshape(1, D))


# ----------------------------------------------------------------------------
# Attention kernel: one batch element x one query block per grid step.
# Reads the fused qkv buffer [B,S,3D] (lane-dense, fetched once per batch
# element since its block index is constant over the query axis), splits the
# heads in VMEM, and writes the output already merged into (tq, D) bf16.
# ----------------------------------------------------------------------------
def _attn_kernel(qkv_ref, m_ref, o_ref, *, heads, dk, tq, scale):
    d = heads * dk
    row = pl.multiple_of(pl.program_id(1) * tq, tq)

    q = qkv_ref[0, pl.ds(row, tq), pl.ds(0, d)]        # (tq, D) bf16, this q block
    k = qkv_ref[0, :, pl.ds(d, d)]                     # (S,  D) bf16
    v = qkv_ref[0, :, pl.ds(2 * d, d)]                 # (S,  D) bf16
    m = m_ref[0]                                       # (tq, S) int32

    outs = []
    for h in range(heads):                             # static unroll over heads
        qh = q[:, h * dk:(h + 1) * dk]                 # (tq, dk)
        kh = k[:, h * dk:(h + 1) * dk]                 # (S,  dk)
        vh = v[:, h * dk:(h + 1) * dk]                 # (S,  dk)
        s = jax.lax.dot_general(
            qh, kh, dimension_numbers=(((1,), (1,)), ((), ())),
            preferred_element_type=jnp.float32) * jnp.float32(scale)   # (tq, S)
        s = jnp.where(m == 0, jnp.float32(-1e9), s)
        s = s - jnp.max(s, axis=-1, keepdims=True)
        p = jnp.exp(s)
        p = p * pl.reciprocal(jnp.sum(p, axis=-1, keepdims=True), approx=True)
        outs.append(jnp.dot(p.astype(vh.dtype), vh,
                            preferred_element_type=jnp.float32))       # (tq, dk)

    o = outs[0] if heads == 1 else jnp.concatenate(outs, axis=-1)       # (tq, D)
    o_ref[0] = o.astype(o_ref.dtype)


def mha_pallas(xn2d, mask_i32, wqkv, bqkv, wo, bo, *, residual2d, B, S, heads):
    """xn2d: pre-normed activations [B*S, D] (bf16).  Returns new residual
    stream [B*S, D] (f32) with the out-projection residual add fused."""
    D3 = wqkv.shape[1]
    D = D3 // 3
    dk = D // heads

    # Fused Q/K/V projection (weights pre-fused at init); bf16 output feeds
    # straight into the attention kernel.
    qkv = linear_pallas(xn2d, wqkv, bqkv, out_dtype=jnp.bfloat16)   # [B*S, 3D]
    qkv = qkv.reshape(B, S, D3)                                      # free view

    # Query-block tiling: bounds scores VMEM to O(tq*S) per head and gives the
    # v7x dual TensorCores a second parallel grid axis.
    tq = _pick_tile(S, 256, 128)

    attn = pl.pallas_call(
        functools.partial(_attn_kernel, heads=heads, dk=dk, tq=tq,
                          scale=1.0 / math.sqrt(dk)),
        out_shape=jax.ShapeDtypeStruct((B, S, D), jnp.bfloat16),
        grid=(B, S // tq),
        in_specs=[
            pl.BlockSpec((1, S, D3), lambda b, qi: (b, 0, 0)),  # fetched once per b
            pl.BlockSpec((1, tq, S), lambda b, qi: (b, qi, 0)),  # original int mask
        ],
        out_specs=pl.BlockSpec((1, tq, D), lambda b, qi: (b, qi, 0)),
        compiler_params=pltpu.CompilerParams(
            dimension_semantics=("parallel", "parallel"),
            vmem_limit_bytes=_VMEM_LIMIT,
        ),
    )(qkv, mask_i32)

    # Output projection with the sublayer residual add fused; attention output
    # is already in (B, S, D) layout -> no XLA transpose, just a free reshape.
    return linear_pallas(attn.reshape(B * S, D), wo, bo, residual=residual2d)


# ----------------------------------------------------------------------------
# Full Transformer forward (glue in plain JAX, hot paths in Pallas)
# ----------------------------------------------------------------------------
def transformer_forward(params, img_vec, ops, trg_mask, *, heads):
    del ops  # embed(操作) * 0 contributes exactly zero (see below)
    B, S, F = img_vec.shape
    D = params["w_img"].shape[1]

    # 图转: Linear(图向量尺寸 -> d_model)
    x = linear_pallas(img_vec.reshape(B * S, F), params["w_img"], params["b_img"])

    # Decoder input: x = 图向量 + embedP(position) + embed(操作) * 0
    # The `* 0` term is exactly zero for any finite embedding table, so the
    # [B,S,D] gather is skipped to save pure HBM bandwidth.
    # TODO(synk): re-enable the token-embedding gather if the `* 0` is removed.
    x = (x.reshape(B, S, D) + params["pos_table"][:S][None, :, :]).reshape(B * S, D)

    mask_i32 = trg_mask.astype(jnp.int32)

    for lp in params["layers"]:
        # self-attention sublayer (pre-norm; residual fused into out-projection;
        # dropout == identity at inference)
        xn = norm_pallas(x, lp["n1_a"], lp["n1_b"])                       # bf16
        x = mha_pallas(xn, mask_i32, lp["wqkv"], lp["bqkv"], lp["wo"], lp["bo"],
                       residual2d=x, B=B, S=S, heads=heads)               # f32

        # feed-forward sublayer (pre-norm; ReLU fused into 1st matmul,
        # residual fused into 2nd matmul)
        xn = norm_pallas(x, lp["n2_a"], lp["n2_b"])                       # bf16
        h = linear_pallas(xn, lp["w1"], lp["b1"], apply_relu=True,
                          out_dtype=jnp.bfloat16)
        x = linear_pallas(h, lp["w2"], lp["b2"], residual=x)              # f32

    # final Norm + output projection
    xf = norm_pallas(x, params["nf_a"], params["nf_b"])                   # bf16
    out = linear_pallas(xf, params["w_out"], params["b_out"])             # f32 logits
    return out.reshape(B, S, params["w_out"].shape[1])


# ----------------------------------------------------------------------------
# Pure-JAX reference (f32 math on the same bf16-stored weights)
# ----------------------------------------------------------------------------
def transformer_forward_ref(params, img_vec, ops, trg_mask, *, heads):
    del ops
    f32 = lambda t: t.astype(jnp.float32)

    def norm(x, a, b):
        mean = x.mean(-1, keepdims=True)
        xc = x - mean
        std = jnp.sqrt((xc * xc).sum(-1, keepdims=True) / (x.shape[-1] - 1))
        return a * xc / (std + 1e-6) + b

    B, S, F = img_vec.shape
    D = params["w_img"].shape[1]
    x = img_vec.reshape(B * S, F) @ f32(params["w_img"]) + params["b_img"]
    x = x.reshape(B, S, D) + params["pos_table"][:S][None]
    for lp in params["layers"]:
        xn = norm(x, lp["n1_a"], lp["n1_b"])
        qkv = xn @ f32(lp["wqkv"]) + lp["bqkv"]
        q, k, v = jnp.split(qkv, 3, axis=-1)
        sh = lambda t: t.reshape(B, S, heads, D // heads).transpose(0, 2, 1, 3)
        q, k, v = sh(q), sh(k), sh(v)
        s = (q @ k.transpose(0, 1, 3, 2)) / math.sqrt(D // heads)
        s = jnp.where(trg_mask[:, None] == 0, -1e9, s)
        p = jax.nn.softmax(s, axis=-1)
        o = (p @ v).transpose(0, 2, 1, 3).reshape(B, S, D)
        x = x + (o @ f32(lp["wo"]) + lp["bo"])
        xn = norm(x, lp["n2_a"], lp["n2_b"])
        h = jnp.maximum(xn @ f32(lp["w1"]) + lp["b1"], 0.0)
        x = x + (h @ f32(lp["w2"]) + lp["b2"])
    xf = norm(x, params["nf_a"], params["nf_b"])
    return xf @ f32(params["w_out"]) + params["b_out"]


# ----------------------------------------------------------------------------
# Deterministic parameter init (weights pre-cast to bf16; Q/K/V pre-fused)
# ----------------------------------------------------------------------------
def init_params(key, *, feat, d_model, vocab, N, d_ff, max_len=1024):
    def dense(k, fan_in, fan_out):
        return (jax.random.normal(k, (fan_in, fan_out), jnp.float32) * 0.02
                ).astype(jnp.bfloat16)

    keys = jax.random.split(key, 4 + N)
    params = {
        "w_img": dense(keys[0], feat, d_model),
        "b_img": jnp.zeros((d_model,), jnp.float32),
        "pos_table": jax.random.normal(keys[1], (max_len, d_model), jnp.float32) * 0.02,
        "tok_table": jax.random.normal(keys[2], (vocab, d_model), jnp.float32) * 0.02,
        "w_out": dense(keys[3], d_model, vocab),
        "b_out": jnp.zeros((vocab,), jnp.float32),
        "nf_a": jnp.ones((d_model,), jnp.float32),
        "nf_b": jnp.zeros((d_model,), jnp.float32),
        "layers": [],
    }
    for i in range(N):
        lk = jax.random.split(keys[4 + i], 6)
        wq, wk, wv = dense(lk[0], d_model, d_model), dense(lk[1], d_model, d_model), \
                     dense(lk[2], d_model, d_model)
        params["layers"].append(
            {
                "n1_a": jnp.ones((d_model,), jnp.float32),
                "n1_b": jnp.zeros((d_model,), jnp.float32),
                "n2_a": jnp.ones((d_model,), jnp.float32),
                "n2_b": jnp.zeros((d_model,), jnp.float32),
                # pre-fused, pre-cast Q/K/V projection
                "wqkv": jnp.concatenate([wq, wk, wv], axis=1),
                "bqkv": jnp.zeros((3 * d_model,), jnp.float32),
                "wo": dense(lk[3], d_model, d_model),
                "bo": jnp.zeros((d_model,), jnp.float32),
                "w1": dense(lk[4], d_model, d_ff),
                "b1": jnp.zeros((d_ff,), jnp.float32),
                "w2": dense(lk[5], d_ff, d_model),
                "b2": jnp.zeros((d_model,), jnp.float32),
            }
        )
    return params


if __name__ == "__main__":
    # Small, forward-consistent shapes (图向量尺寸 scaled down from 6*6*2048).
    B, S = 2, 8
    FEAT = 64          # 图向量尺寸
    D_MODEL = 32
    HEADS = 4
    N_LAYERS = 2
    VOCAB = 16
    D_FF = 4 * D_MODEL

    key = jax.random.PRNGKey(0)
    k_param, k_img, k_ops = jax.random.split(key, 3)

    params = init_params(
        k_param, feat=FEAT, d_model=D_MODEL, vocab=VOCAB, N=N_LAYERS, d_ff=D_FF
    )

    img_vec = jax.random.normal(k_img, (B, S, FEAT), jnp.float32)       # 图向量
    ops = jax.random.randint(k_ops, (B, S), 0, VOCAB)                   # 操作 (token ids)
    trg_mask = jnp.broadcast_to(
        jnp.tril(jnp.ones((S, S), jnp.int32)), (B, S, S)
    )                                                                   # causal mask

    fwd = jax.jit(functools.partial(transformer_forward, heads=HEADS))
    out = fwd(params, img_vec, ops, trg_mask)
    jax.block_until_ready(out)
    assert out.shape == (B, S, VOCAB)

    # Loose-tolerance parity check vs pure-JAX f32 reference (bf16 activations
    # and approx reciprocals account for the small deviation).
    ref = transformer_forward_ref(params, img_vec, ops, trg_mask, heads=HEADS)
    err = float(jnp.max(jnp.abs(out - ref)))
    assert err < 5e-2, f"max abs err vs reference: {err}"
    print("KERNEL_OK")
</pallas_src>

<mosaic_0001>
module attributes {stable_mosaic.version = 11 : i64} {
  func.func @_matmul_kernel(%arg0: i32, %arg1: i32, %arg2: i32, %arg3: memref<16x64xf32, #tpu.memory_space<vmem>>, %arg4: memref<64x32xbf16, #tpu.memory_space<vmem>>, %arg5: memref<1x32xf32, #tpu.memory_space<vmem>>, %arg6: memref<16x32xf32, #tpu.memory_space<vmem>>, %arg7: memref<16x32xf32, #tpu.memory_space<vmem>>) attributes {dimension_semantics = [#tpu.dimension_semantics<parallel>, #tpu.dimension_semantics<parallel>, #tpu.dimension_semantics<arbitrary>], iteration_bounds = array<i64: 1, 1, 1>, scalar_prefetch = 0 : i64, scratch_operands = 1 : i64, tpu.core_type = #tpu.core_type<tc>, window_params = [{transform_indices = @transform_0, window_bounds = array<i64: 16, 64>}, {transform_indices = @transform_1, window_bounds = array<i64: 64, 32>}, {transform_indices = @transform_2, window_bounds = array<i64: 1, 32>}, {transform_indices = @transform_3, window_bounds = array<i64: 16, 32>}]} {
    %c0_i32 = arith.constant 0 : i32
    %0 = arith.cmpi eq, %arg2, %c0_i32 : i32
    %1 = arith.extui %0 : i1 to i32
    %c0_i32_0 = arith.constant 0 : i32
    %2 = arith.cmpi ne, %1, %c0_i32_0 : i32
    scf.if %2 {
      %cst_10 = arith.constant 0.000000e+00 : f32
      %13 = vector.broadcast %cst_10 : f32 to vector<16x32xf32>
      %c0_11 = arith.constant 0 : index
      %c0_12 = arith.constant 0 : index
      %14 = vector.load %arg7[%c0_11, %c0_12] : memref<16x32xf32, #tpu.memory_space<vmem>>, vector<16x32xf32>
      tpu.vector_store %arg7[%c0_11, %c0_12], %13 {strides = array<i32>} : memref<16x32xf32, #tpu.memory_space<vmem>>, vector<16x32xf32>,
    } else {
    }
    %c0 = arith.constant 0 : index
    %c0_1 = arith.constant 0 : index
    %3 = vector.load %arg7[%c0, %c0_1] : memref<16x32xf32, #tpu.memory_space<vmem>>, vector<16x32xf32>
    %c0_2 = arith.constant 0 : index
    %c0_3 = arith.constant 0 : index
    %4 = vector.load %arg3[%c0_2, %c0_3] : memref<16x64xf32, #tpu.memory_space<vmem>>, vector<16x64xf32>
    %5 = arith.truncf %4 : vector<16x64xf32> to vector<16x64xbf16>
    %c0_4 = arith.constant 0 : index
    %c0_5 = arith.constant 0 : index
    %6 = vector.load %arg4[%c0_4, %c0_5] : memref<64x32xbf16, #tpu.memory_space<vmem>>, vector<64x32xbf16>
    %cst = arith.constant dense<0.000000e+00> : vector<16x32xf32>
    %7 = tpu.matmul %5, %6, %cst {dimension_numbers = #tpu.dot_dimension_numbers<[1], [0], [0], [1], [0, 0, 1, 1], [], []>} : vector<16x64xbf16>, vector<64x32xbf16>, vector<16x32xf32> -> vector<16x32xf32>
    %8 = arith.addf %3, %7 : vector<16x32xf32>
    %c0_6 = arith.constant 0 : index
    %c0_7 = arith.constant 0 : index
    %9 = vector.load %arg7[%c0_6, %c0_7] : memref<16x32xf32, #tpu.memory_space<vmem>>, vector<16x32xf32>
    tpu.vector_store %arg7[%c0_6, %c0_7], %8 {strides = array<i32>} : memref<16x32xf32, #tpu.memory_space<vmem>>, vector<16x32xf32>,
    %c0_i32_8 = arith.constant 0 : i32
    %10 = arith.cmpi eq, %arg2, %c0_i32_8 : i32
    %11 = arith.extui %10 : i1 to i32
    %c0_i32_9 = arith.constant 0 : i32
    %12 = arith.cmpi ne, %11, %c0_i32_9 : i32
    scf.if %12 {
      %c0_10 = arith.constant 0 : index
      %c0_11 = arith.constant 0 : index
      %13 = vector.load %arg7[%c0_10, %c0_11] : memref<16x32xf32, #tpu.memory_space<vmem>>, vector<16x32xf32>
      %c0_12 = arith.constant 0 : index
      %c0_13 = arith.constant 0 : index
      %14 = vector.load %arg5[%c0_12, %c0_13] : memref<1x32xf32, #tpu.memory_space<vmem>>, vector<1x32xf32>
      %15 = vector.broadcast %14 : vector<1x32xf32> to vector<16x32xf32>
      %16 = arith.addf %13, %15 : vector<16x32xf32>
      %c0_14 = arith.constant 0 : index
      %c0_15 = arith.constant 0 : index
      %17 = vector.load %arg6[%c0_14, %c0_15] : memref<16x32xf32, #tpu.memory_space<vmem>>, vector<16x32xf32>
      tpu.vector_store %arg6[%c0_14, %c0_15], %16 {strides = array<i32>} : memref<16x32xf32, #tpu.memory_space<vmem>>, vector<16x32xf32>,
    } else {
    }
    return
  }
  func.func @transform_0(%arg0: i32, %arg1: i32, %arg2: i32) -> (i32, i32) {
    %c0_i32 = arith.constant 0 : i32
    return %arg0, %arg2 : i32, i32
  }
  func.func @transform_1(%arg0: i32, %arg1: i32, %arg2: i32) -> (i32, i32) {
    %c0_i32 = arith.constant 0 : i32
    return %arg2, %arg1 : i32, i32
  }
  func.func @transform_2(%arg0: i32, %arg1: i32, %arg2: i32) -> (i32, i32) {
    %c0_i32 = arith.constant 0 : i32
    %c0_i32_0 = arith.constant 0 : i32
    return %c0_i32, %arg1 : i32, i32
  }
  func.func @transform_3(%arg0: i32, %arg1: i32, %arg2: i32) -> (i32, i32) {
    %c0_i32 = arith.constant 0 : i32
    return %arg0, %arg1 : i32, i32
  }
}

module attributes {stable_mosaic.version = 11 : i64} {
  func.func @_matmul_kernel(%arg0: i32, %arg1: i32, %arg2: i32, %arg3: memref<16x32xbf16, #tpu.memory_space<vmem>>, %arg4: memref<32x96xbf16, #tpu.memory_space<vmem>>, %arg5: memref<1x96xf32, #tpu.memory_space<vmem>>, %arg6: memref<16x96xbf16, #tpu.memory_space<vmem>>, %arg7: memref<16x96xf32, #tpu.memory_space<vmem>>) attributes {dimension_semantics = [#tpu.dimension_semantics<parallel>, #tpu.dimension_semantics<parallel>, #tpu.dimension_semantics<arbitrary>], iteration_bounds = array<i64: 1, 1, 1>, scalar_prefetch = 0 : i64, scratch_operands = 1 : i64, tpu.core_type = #tpu.core_type<tc>, window_params = [{transform_indices = @transform_0, window_bounds = array<i64: 16, 32>}, {transform_indices = @transform_1, window_bounds = array<i64: 32, 96>}, {transform_indices = @transform_2, window_bounds = array<i64: 1, 96>}, {transform_indices = @transform_3, window_bounds = array<i64: 16, 96>}]} {
    %c0_i32 = arith.constant 0 : i32
    %0 = arith.cmpi eq, %arg2, %c0_i32 : i32
    %1 = arith.extui %0 : i1 to i32
    %c0_i32_0 = arith.constant 0 : i32
    %2 = arith.cmpi ne, %1, %c0_i32_0 : i32
    scf.if %2 {
      %cst_10 = arith.constant 0.000000e+00 : f32
      %12 = vector.broadcast %cst_10 : f32 to vector<16x96xf32>
      %c0_11 = arith.constant 0 : index
      %c0_12 = arith.constant 0 : index
      %13 = vector.load %arg7[%c0_11, %c0_12] : memref<16x96xf32, #tpu.memory_space<vmem>>, vector<16x96xf32>
      tpu.vector_store %arg7[%c0_11, %c0_12], %12 {strides = array<i32>} : memref<16x96xf32, #tpu.memory_space<vmem>>, vector<16x96xf32>,
    } else {
    }
    %c0 = arith.constant 0 : index
    %c0_1 = arith.constant 0 : index
    %3 = vector.load %arg7[%c0, %c0_1] : memref<16x96xf32, #tpu.memory_space<vmem>>, vector<16x96xf32>
    %c0_2 = arith.constant 0 : index
    %c0_3 = arith.constant 0 : index
    %4 = vector.load %arg3[%c0_2, %c0_3] : memref<16x32xbf16, #tpu.memory_space<vmem>>, vector<16x32xbf16>
    %c0_4 = arith.constant 0 : index
    %c0_5 = arith.constant 0 : index
    %5 = vector.load %arg4[%c0_4, %c0_5] : memref<32x96xbf16, #tpu.memory_space<vmem>>, vector<32x96xbf16>
    %cst = arith.constant dense<0.000000e+00> : vector<16x96xf32>
    %6 = tpu.matmul %4, %5, %cst {dimension_numbers = #tpu.dot_dimension_numbers<[1], [0], [0], [1], [0, 0, 1, 1], [], []>} : vector<16x32xbf16>, vector<32x96xbf16>, vector<16x96xf32> -> vector<16x96xf32>
    %7 = arith.addf %3, %6 : vector<16x96xf32>
    %c0_6 = arith.constant 0 : index
    %c0_7 = arith.constant 0 : index
    %8 = vector.load %arg7[%c0_6, %c0_7] : memref<16x96xf32, #tpu.memory_space<vmem>>, vector<16x96xf32>
    tpu.vector_store %arg7[%c0_6, %c0_7], %7 {strides = array<i32>} : memref<16x96xf32, #tpu.memory_space<vmem>>, vector<16x96xf32>,
    %c0_i32_8 = arith.constant 0 : i32
    %9 = arith.cmpi eq, %arg2, %c0_i32_8 : i32
    %10 = arith.extui %9 : i1 to i32
    %c0_i32_9 = arith.constant 0 : i32
    %11 = arith.cmpi ne, %10, %c0_i32_9 : i32
    scf.if %11 {
      %c0_10 = arith.constant 0 : index
      %c0_11 = arith.constant 0 : index
      %12 = vector.load %arg7[%c0_10, %c0_11] : memref<16x96xf32, #tpu.memory_space<vmem>>, vector<16x96xf32>
      %c0_12 = arith.constant 0 : index
      %c0_13 = arith.constant 0 : index
      %13 = vector.load %arg5[%c0_12, %c0_13] : memref<1x96xf32, #tpu.memory_space<vmem>>, vector<1x96xf32>
      %14 = vector.broadcast %13 : vector<1x96xf32> to vector<16x96xf32>
      %15 = arith.addf %12, %14 : vector<16x96xf32>
      %16 = arith.truncf %15 : vector<16x96xf32> to vector<16x96xbf16>
      %c0_14 = arith.constant 0 : index
      %c0_15 = arith.constant 0 : index
      %17 = vector.load %arg6[%c0_14, %c0_15] : memref<16x96xbf16, #tpu.memory_space<vmem>>, vector<16x96xbf16>
      tpu.vector_store %arg6[%c0_14, %c0_15], %16 {strides = array<i32>} : memref<16x96xbf16, #tpu.memory_space<vmem>>, vector<16x96xbf16>,
    } else {
    }
    return
  }
  func.func @transform_0(%arg0: i32, %arg1: i32, %arg2: i32) -> (i32, i32) {
    %c0_i32 = arith.constant 0 : i32
    return %arg0, %arg2 : i32, i32
  }
  func.func @transform_1(%arg0: i32, %arg1: i32, %arg2: i32) -> (i32, i32) {
    %c0_i32 = arith.constant 0 : i32
    return %arg2, %arg1 : i32, i32
  }
  func.func @transform_2(%arg0: i32, %arg1: i32, %arg2: i32) -> (i32, i32) {
    %c0_i32 = arith.constant 0 : i32
    %c0_i32_0 = arith.constant 0 : i32
    return %c0_i32, %arg1 : i32, i32
  }
  func.func @transform_3(%arg0: i32, %arg1: i32, %arg2: i32) -> (i32, i32) {
    %c0_i32 = arith.constant 0 : i32
    return %arg0, %arg1 : i32, i32
  }
}

module attributes {stable_mosaic.version = 11 : i64} {
  func.func @_norm_kernel(%arg0: i32, %arg1: memref<16x32xf32, #tpu.memory_space<vmem>>, %arg2: memref<1x32xf32, #tpu.memory_space<vmem>>, %arg3: memref<1x32xf32, #tpu.memory_space<vmem>>, %arg4: memref<16x32xbf16, #tpu.memory_space<vmem>>) attributes {dimension_semantics = [#tpu.dimension_semantics<parallel>], iteration_bounds = array<i64: 1>, scalar_prefetch = 0 : i64, scratch_operands = 0 : i64, tpu.core_type = #tpu.core_type<tc>, window_params = [{transform_indices = @transform_0, window_bounds = array<i64: 16, 32>}, {pipeline_mode = #tpu.pipeline_mode<synchronous>, transform_indices = @transform_1, window_bounds = array<i64: 1, 32>}, {pipeline_mode = #tpu.pipeline_mode<synchronous>, transform_indices = @transform_2, window_bounds = array<i64: 1, 32>}, {transform_indices = @transform_3, window_bounds = array<i64: 16, 32>}]} {
    %c0 = arith.constant 0 : index
    %c0_0 = arith.constant 0 : index
    %0 = vector.load %arg1[%c0, %c0_0] : memref<16x32xf32, #tpu.memory_space<vmem>>, vector<16x32xf32>
    %cst = arith.constant dense<0.000000e+00> : vector<16xf32>
    %1 = vector.multi_reduction <add>, %0, %cst [1] : vector<16x32xf32> to vector<16xf32>
    %2 = vector.shape_cast %1 : vector<16xf32> to vector<16x1xf32>
    %cst_1 = arith.constant 3.200000e+01 : f32
    %3 = vector.broadcast %cst_1 : f32 to vector<16x1xf32>
    %4 = arith.divf %2, %3 : vector<16x1xf32>
    %5 = vector.broadcast %4 : vector<16x1xf32> to vector<16x32xf32>
    %6 = arith.subf %0, %5 : vector<16x32xf32>
    %7 = arith.mulf %6, %6 : vector<16x32xf32>
    %cst_2 = arith.constant dense<0.000000e+00> : vector<16xf32>
    %8 = vector.multi_reduction <add>, %7, %cst_2 [1] : vector<16x32xf32> to vector<16xf32>
    %9 = vector.shape_cast %8 : vector<16xf32> to vector<16x1xf32>
    %cst_3 = arith.constant 0.0322580636 : f32
    %10 = vector.broadcast %cst_3 : f32 to vector<16x1xf32>
    %11 = arith.mulf %9, %10 : vector<16x1xf32>
    %12 = math.sqrt %11 : vector<16x1xf32>
    %cst_4 = arith.constant 9.99999997E-7 : f32
    %13 = vector.broadcast %cst_4 : f32 to vector<16x1xf32>
    %14 = arith.addf %12, %13 : vector<16x1xf32>
    %15 = tpu.reciprocal %14 {approx = true} : vector<16x1xf32> -> vector<16x1xf32>
    %c0_5 = arith.constant 0 : index
    %c0_6 = arith.constant 0 : index
    %16 = vector.load %arg2[%c0_5, %c0_6] : memref<1x32xf32, #tpu.memory_space<vmem>>, vector<1x32xf32>
    %17 = vector.broadcast %16 : vector<1x32xf32> to vector<16x32xf32>
    %18 = arith.mulf %17, %6 : vector<16x32xf32>
    %19 = vector.broadcast %15 : vector<16x1xf32> to vector<16x32xf32>
    %20 = arith.mulf %18, %19 : vector<16x32xf32>
    %c0_7 = arith.constant 0 : index
    %c0_8 = arith.constant 0 : index
    %21 = vector.load %arg3[%c0_7, %c0_8] : memref<1x32xf32, #tpu.memory_space<vmem>>, vector<1x32xf32>
    %22 = vector.broadcast %21 : vector<1x32xf32> to vector<16x32xf32>
    %23 = arith.addf %20, %22 : vector<16x32xf32>
    %24 = arith.truncf %23 : vector<16x32xf32> to vector<16x32xbf16>
    %c0_9 = arith.constant 0 : index
    %c0_10 = arith.constant 0 : index
    %25 = vector.load %arg4[%c0_9, %c0_10] : memref<16x32xbf16, #tpu.memory_space<vmem>>, vector<16x32xbf16>
    tpu.vector_store %arg4[%c0_9, %c0_10], %24 {strides = array<i32>} : memref<16x32xbf16, #tpu.memory_space<vmem>>, vector<16x32xbf16>,
    return
  }
  func.func @transform_0(%arg0: i32) -> (i32, i32) {
    %c0_i32 = arith.constant 0 : i32
    %c0_i32_0 = arith.constant 0 : i32
    return %arg0, %c0_i32 : i32, i32
  }
  func.func @transform_1(%arg0: i32) -> (i32, i32) {
    %c0_i32 = arith.constant 0 : i32
    %c0_i32_0 = arith.constant 0 : i32
    %c0_i32_1 = arith.constant 0 : i32
    return %c0_i32, %c0_i32_0 : i32, i32
  }
  func.func @transform_2(%arg0: i32) -> (i32, i32) {
    %c0_i32 = arith.constant 0 : i32
    %c0_i32_0 = arith.constant 0 : i32
    %c0_i32_1 = arith.constant 0 : i32
    return %c0_i32, %c0_i32_0 : i32, i32
  }
  func.func @transform_3(%arg0: i32) -> (i32, i32) {
    %c0_i32 = arith.constant 0 : i32
    %c0_i32_0 = arith.constant 0 : i32
    return %arg0, %c0_i32 : i32, i32
  }
}

module attributes {stable_mosaic.version = 11 : i64} {
  func.func @_attn_kernel(%arg0: i32, %arg1: i32, %arg2: memref<1x8x96xbf16, #tpu.memory_space<vmem>>, %arg3: memref<1x8x8xi32, #tpu.memory_space<vmem>>, %arg4: memref<1x8x32xbf16, #tpu.memory_space<vmem>>) attributes {dimension_semantics = [#tpu.dimension_semantics<parallel>, #tpu.dimension_semantics<parallel>], iteration_bounds = array<i64: 2, 1>, scalar_prefetch = 0 : i64, scratch_operands = 0 : i64, tpu.core_type = #tpu.core_type<tc>, window_params = [{transform_indices = @transform_0, window_bounds = array<i64: 1, 8, 96>}, {transform_indices = @transform_1, window_bounds = array<i64: 1, 8, 8>}, {transform_indices = @transform_2, window_bounds = array<i64: 1, 8, 32>}]} {
    %c8_i32 = arith.constant 8 : i32
    %0 = arith.muli %arg1, %c8_i32 : i32
    %1 = tpu.assume_multiple %0, 8 : i32
    %c0 = arith.constant 0 : index
    %2 = arith.index_cast %1 : i32 to index
    %c0_0 = arith.constant 0 : index
    %3 = vector.load %arg2[%c0, %2, %c0_0] : memref<1x8x96xbf16, #tpu.memory_space<vmem>>, vector<1x8x32xbf16>
    %4 = vector.shape_cast %3 : vector<1x8x32xbf16> to vector<8x32xbf16>
    %c0_1 = arith.constant 0 : index
    %c0_2 = arith.constant 0 : index
    %c32 = arith.constant 32 : index
    %5 = vector.load %arg2[%c0_1, %c0_2, %c32] : memref<1x8x96xbf16, #tpu.memory_space<vmem>>, vector<1x8x32xbf16>
    %6 = vector.shape_cast %5 : vector<1x8x32xbf16> to vector<8x32xbf16>
    %c0_3 = arith.constant 0 : index
    %c0_4 = arith.constant 0 : index
    %c64 = arith.constant 64 : index
    %7 = vector.load %arg2[%c0_3, %c0_4, %c64] : memref<1x8x96xbf16, #tpu.memory_space<vmem>>, vector<1x8x32xbf16>
    %8 = vector.shape_cast %7 : vector<1x8x32xbf16> to vector<8x32xbf16>
    %c0_5 = arith.constant 0 : index
    %c0_6 = arith.constant 0 : index
    %c0_7 = arith.constant 0 : index
    %9 = vector.load %arg3[%c0_5, %c0_6, %c0_7] : memref<1x8x8xi32, #tpu.memory_space<vmem>>, vector<1x8x8xi32>
    %10 = vector.shape_cast %9 : vector<1x8x8xi32> to vector<8x8xi32>
    %11 = vector.extract_strided_slice %4 {offsets = [0, 0], sizes = [8, 8], strides = [1, 1]} : vector<8x32xbf16> to vector<8x8xbf16>
    %12 = vector.extract_strided_slice %6 {offsets = [0, 0], sizes = [8, 8], strides = [1, 1]} : vector<8x32xbf16> to vector<8x8xbf16>
    %13 = vector.extract_strided_slice %8 {offsets = [0, 0], sizes = [8, 8], strides = [1, 1]} : vector<8x32xbf16> to vector<8x8xbf16>
    %cst = arith.constant dense<0.000000e+00> : vector<8x8xf32>
    %14 = tpu.matmul %11, %12, %cst {dimension_numbers = #tpu.dot_dimension_numbers<[1], [1], [0], [0], [0, 0, 1, 0], [], []>} : vector<8x8xbf16>, vector<8x8xbf16>, vector<8x8xf32> -> vector<8x8xf32>
    %cst_8 = arith.constant 0.353553385 : f32
    %15 = vector.broadcast %cst_8 : f32 to vector<8x8xf32>
    %16 = arith.mulf %14, %15 : vector<8x8xf32>
    %c0_i32 = arith.constant 0 : i32
    %17 = vector.broadcast %c0_i32 : i32 to vector<8x8xi32>
    %18 = arith.cmpi eq, %10, %17 : vector<8x8xi32>
    %cst_9 = arith.constant -1.000000e+09 : f32
    %19 = vector.broadcast %cst_9 : f32 to vector<8x8xf32>
    %20 = arith.select %18, %19, %16 : vector<8x8xi1>, vector<8x8xf32>
    %cst_10 = arith.constant dense<0xFF800000> : vector<8xf32>
    %21 = vector.multi_reduction <maximumf>, %20, %cst_10 [1] : vector<8x8xf32> to vector<8xf32>
    %22 = vector.shape_cast %21 : vector<8xf32> to vector<8x1xf32>
    %23 = vector.broadcast %22 : vector<8x1xf32> to vector<8x8xf32>
    %24 = arith.subf %20, %23 : vector<8x8xf32>
    %25 = math.exp %24 : vector<8x8xf32>
    %cst_11 = arith.constant dense<0.000000e+00> : vector<8xf32>
    %26 = vector.multi_reduction <add>, %25, %cst_11 [1] : vector<8x8xf32> to vector<8xf32>
    %27 = vector.shape_cast %26 : vector<8xf32> to vector<8x1xf32>
    %28 = tpu.reciprocal %27 {approx = true} : vector<8x1xf32> -> vector<8x1xf32>
    %29 = vector.broadcast %28 : vector<8x1xf32> to vector<8x8xf32>
    %30 = arith.mulf %25, %29 : vector<8x8xf32>
    %31 = arith.truncf %30 : vector<8x8xf32> to vector<8x8xbf16>
    %cst_12 = arith.constant dense<0.000000e+00> : vector<8x8xf32>
    %32 = tpu.matmul %31, %13, %cst_12 {dimension_numbers = #tpu.dot_dimension_numbers<[1], [0], [0], [1], [0, 0, 1, 1], [], []>} : vector<8x8xbf16>, vector<8x8xbf16>, vector<8x8xf32> -> vector<8x8xf32>
    %33 = vector.extract_strided_slice %4 {offsets = [0, 8], sizes = [8, 8], strides = [1, 1]} : vector<8x32xbf16> to vector<8x8xbf16>
    %34 = vector.extract_strided_slice %6 {offsets = [0, 8], sizes = [8, 8], strides = [1, 1]} : vector<8x32xbf16> to vector<8x8xbf16>
    %35 = vector.extract_strided_slice %8 {offsets = [0, 8], sizes = [8, 8], strides = [1, 1]} : vector<8x32xbf16> to vector<8x8xbf16>
    %cst_13 = arith.constant dense<0.000000e+00> : vector<8x8xf32>
    %36 = tpu.matmul %33, %34, %cst_13 {dimension_numbers = #tpu.dot_dimension_numbers<[1], [1], [0], [0], [0, 0, 1, 0], [], []>} : vector<8x8xbf16>, vector<8x8xbf16>, vector<8x8xf32> -> vector<8x8xf32>
    %cst_14 = arith.constant 0.353553385 : f32
    %37 = vector.broadcast %cst_14 : f32 to vector<8x8xf32>
    %38 = arith.mulf %36, %37 : vector<8x8xf32>
    %c0_i32_15 = arith.constant 0 : i32
    %39 = vector.broadcast %c0_i32_15 : i32 to vector<8x8xi32>
    %40 = arith.cmpi eq, %10, %39 : vector<8x8xi32>
    %cst_16 = arith.constant -1.000000e+09 : f32
    %41 = vector.broadcast %cst_16 : f32 to vector<8x8xf32>
    %42 = arith.select %40, %41, %38 : vector<8x8xi1>, vector<8x8xf32>
    %cst_17 = arith.constant dense<0xFF800000> : vector<8xf32>
    %43 = vector.multi_reduction <maximumf>, %42, %cst_17 [1] : vector<8x8xf32> to vector<8xf32>
    %44 = vector.shape_cast %43 : vector<8xf32> to vector<8x1xf32>
    %45 = vector.broadcast %44 : vector<8x1xf32> to vector<8x8xf32>
    %46 = arith.subf %42, %45 : vector<8x8xf32>
    %47 = math.exp %46 : vector<8x8xf32>
    %cst_18 = arith.constant dense<0.000000e+00> : vector<8xf32>
    %48 = vector.multi_reduction <add>, %47, %cst_18 [1] : vector<8x8xf32> to vector<8xf32>
    %49 = vector.shape_cast %48 : vector<8xf32> to vector<8x1xf32>
    %50 = tpu.reciprocal %49 {approx = true} : vector<8x1xf32> -> vector<8x1xf32>
    %51 = vector.broadcast %50 : vector<8x1xf32> to vector<8x8xf32>
    %52 = arith.mulf %47, %51 : vector<8x8xf32>
    %53 = arith.truncf %52 : vector<8x8xf32> to vector<8x8xbf16>
    %cst_19 = arith.constant dense<0.000000e+00> : vector<8x8xf32>
    %54 = tpu.matmul %53, %35, %cst_19 {dimension_numbers = #tpu.dot_dimension_numbers<[1], [0], [0], [1], [0, 0, 1, 1], [], []>} : vector<8x8xbf16>, vector<8x8xbf16>, vector<8x8xf32> -> vector<8x8xf32>
    %55 = vector.extract_strided_slice %4 {offsets = [0, 16], sizes = [8, 8], strides = [1, 1]} : vector<8x32xbf16> to vector<8x8xbf16>
    %56 = vector.extract_strided_slice %6 {offsets = [0, 16], sizes = [8, 8], strides = [1, 1]} : vector<8x32xbf16> to vector<8x8xbf16>
    %57 = vector.extract_strided_slice %8 {offsets = [0, 16], sizes = [8, 8], strides = [1, 1]} : vector<8x32xbf16> to vector<8x8xbf16>
    %cst_20 = arith.constant dense<0.000000e+00> : vector<8x8xf32>
    %58 = tpu.matmul %55, %56, %cst_20 {dimension_numbers = #tpu.dot_dimension_numbers<[1], [1], [0], [0], [0, 0, 1, 0], [], []>} : vector<8x8xbf16>, vector<8x8xbf16>, vector<8x8xf32> -> vector<8x8xf32>
    %cst_21 = arith.constant 0.353553385 : f32
    %59 = vector.broadcast %cst_21 : f32 to vector<8x8xf32>
    %60 = arith.mulf %58, %59 : vector<8x8xf32>
    %c0_i32_22 = arith.constant 0 : i32
    %61 = vector.broadcast %c0_i32_22 : i32 to vector<8x8xi32>
    %62 = arith.cmpi eq, %10, %61 : vector<8x8xi32>
    %cst_23 = arith.constant -1.000000e+09 : f32
    %63 = vector.broadcast %cst_23 : f32 to vector<8x8xf32>
    %64 = arith.select %62, %63, %60 : vector<8x8xi1>, vector<8x8xf32>
    %cst_24 = arith.constant dense<0xFF800000> : vector<8xf32>
    %65 = vector.multi_reduction <maximumf>, %64, %cst_24 [1] : vector<8x8xf32> to vector<8xf32>
    %66 = vector.shape_cast %65 : vector<8xf32> to vector<8x1xf32>
    %67 = vector.broadcast %66 : vector<8x1xf32> to vector<8x8xf32>
    %68 = arith.subf %64, %67 : vector<8x8xf32>
    %69 = math.exp %68 : vector<8x8xf32>
    %cst_25 = arith.constant dense<0.000000e+00> : vector<8xf32>
    %70 = vector.multi_reduction <add>, %69, %cst_25 [1] : vector<8x8xf32> to vector<8xf32>
    %71 = vector.shape_cast %70 : vector<8xf32> to vector<8x1xf32>
    %72 = tpu.reciprocal %71 {approx = true} : vector<8x1xf32> -> vector<8x1xf32>
    %73 = vector.broadcast %72 : vector<8x1xf32> to vector<8x8xf32>
    %74 = arith.mulf %69, %73 : vector<8x8xf32>
    %75 = arith.truncf %74 : vector<8x8xf32> to vector<8x8xbf16>
    %cst_26 = arith.constant dense<0.000000e+00> : vector<8x8xf32>
    %76 = tpu.matmul %75, %57, %cst_26 {dimension_numbers = #tpu.dot_dimension_numbers<[1], [0], [0], [1], [0, 0, 1, 1], [], []>} : vector<8x8xbf16>, vector<8x8xbf16>, vector<8x8xf32> -> vector<8x8xf32>
    %77 = vector.extract_strided_slice %4 {offsets = [0, 24], sizes = [8, 8], strides = [1, 1]} : vector<8x32xbf16> to vector<8x8xbf16>
    %78 = vector.extract_strided_slice %6 {offsets = [0, 24], sizes = [8, 8], strides = [1, 1]} : vector<8x32xbf16> to vector<8x8xbf16>
    %79 = vector.extract_strided_slice %8 {offsets = [0, 24], sizes = [8, 8], strides = [1, 1]} : vector<8x32xbf16> to vector<8x8xbf16>
    %cst_27 = arith.constant dense<0.000000e+00> : vector<8x8xf32>
    %80 = tpu.matmul %77, %78, %cst_27 {dimension_numbers = #tpu.dot_dimension_numbers<[1], [1], [0], [0], [0, 0, 1, 0], [], []>} : vector<8x8xbf16>, vector<8x8xbf16>, vector<8x8xf32> -> vector<8x8xf32>
    %cst_28 = arith.constant 0.353553385 : f32
    %81 = vector.broadcast %cst_28 : f32 to vector<8x8xf32>
    %82 = arith.mulf %80, %81 : vector<8x8xf32>
    %c0_i32_29 = arith.constant 0 : i32
    %83 = vector.broadcast %c0_i32_29 : i32 to vector<8x8xi32>
    %84 = arith.cmpi eq, %10, %83 : vector<8x8xi32>
    %cst_30 = arith.constant -1.000000e+09 : f32
    %85 = vector.broadcast %cst_30 : f32 to vector<8x8xf32>
    %86 = arith.select %84, %85, %82 : vector<8x8xi1>, vector<8x8xf32>
    %cst_31 = arith.constant dense<0xFF800000> : vector<8xf32>
    %87 = vector.multi_reduction <maximumf>, %86, %cst_31 [1] : vector<8x8xf32> to vector<8xf32>
    %88 = vector.shape_cast %87 : vector<8xf32> to vector<8x1xf32>
    %89 = vector.broadcast %88 : vector<8x1xf32> to vector<8x8xf32>
    %90 = arith.subf %86, %89 : vector<8x8xf32>
    %91 = math.exp %90 : vector<8x8xf32>
    %cst_32 = arith.constant dense<0.000000e+00> : vector<8xf32>
    %92 = vector.multi_reduction <add>, %91, %cst_32 [1] : vector<8x8xf32> to vector<8xf32>
    %93 = vector.shape_cast %92 : vector<8xf32> to vector<8x1xf32>
    %94 = tpu.reciprocal %93 {approx = true} : vector<8x1xf32> -> vector<8x1xf32>
    %95 = vector.broadcast %94 : vector<8x1xf32> to vector<8x8xf32>
    %96 = arith.mulf %91, %95 : vector<8x8xf32>
    %97 = arith.truncf %96 : vector<8x8xf32> to vector<8x8xbf16>
    %cst_33 = arith.constant dense<0.000000e+00> : vector<8x8xf32>
    %98 = tpu.matmul %97, %79, %cst_33 {dimension_numbers = #tpu.dot_dimension_numbers<[1], [0], [0], [1], [0, 0, 1, 1], [], []>} : vector<8x8xbf16>, vector<8x8xbf16>, vector<8x8xf32> -> vector<8x8xf32>
    %99 = tpu.concatenate %32, %54, %76, %98 in 1 : vector<8x8xf32>, vector<8x8xf32>, vector<8x8xf32>, vector<8x8xf32> -> vector<8x32xf32>
    %100 = arith.truncf %99 : vector<8x32xf32> to vector<8x32xbf16>
    %c0_34 = arith.constant 0 : index
    %c0_35 = arith.constant 0 : index
    %c0_36 = arith.constant 0 : index
    %101 = vector.load %arg4[%c0_34, %c0_35, %c0_36] : memref<1x8x32xbf16, #tpu.memory_space<vmem>>, vector<1x8x32xbf16>
    %102 = vector.shape_cast %101 : vector<1x8x32xbf16> to vector<8x32xbf16>
    %103 = vector.shape_cast %100 : vector<8x32xbf16> to vector<1x8x32xbf16>
    tpu.vector_store %arg4[%c0_34, %c0_35, %c0_36], %103 {strides = array<i32>} : memref<1x8x32xbf16, #tpu.memory_space<vmem>>, vector<1x8x32xbf16>,
    return
  }
  func.func @transform_0(%arg0: i32, %arg1: i32) -> (i32, i32, i32) {
    %c0_i32 = arith.constant 0 : i32
    %c0_i32_0 = arith.constant 0 : i32
    %c0_i32_1 = arith.constant 0 : i32
    return %arg0, %c0_i32, %c0_i32_0 : i32, i32, i32
  }
  func.func @transform_1(%arg0: i32, %arg1: i32) -> (i32, i32, i32) {
    %c0_i32 = arith.constant 0 : i32
    %c0_i32_0 = arith.constant 0 : i32
    return %arg0, %arg1, %c0_i32 : i32, i32, i32
  }
  func.func @transform_2(%arg0: i32, %arg1: i32) -> (i32, i32, i32) {
    %c0_i32 = arith.constant 0 : i32
    %c0_i32_0 = arith.constant 0 : i32
    return %arg0, %arg1, %c0_i32 : i32, i32, i32
  }
}

module attributes {stable_mosaic.version = 11 : i64} {
  func.func @_matmul_res_kernel(%arg0: i32, %arg1: i32, %arg2: i32, %arg3: memref<16x32xbf16, #tpu.memory_space<vmem>>, %arg4: memref<32x32xbf16, #tpu.memory_space<vmem>>, %arg5: memref<1x32xf32, #tpu.memory_space<vmem>>, %arg6: memref<16x32xf32, #tpu.memory_space<vmem>>, %arg7: memref<16x32xf32, #tpu.memory_space<vmem>>, %arg8: memref<16x32xf32, #tpu.memory_space<vmem>>) attributes {dimension_semantics = [#tpu.dimension_semantics<parallel>, #tpu.dimension_semantics<parallel>, #tpu.dimension_semantics<arbitrary>], iteration_bounds = array<i64: 1, 1, 1>, scalar_prefetch = 0 : i64, scratch_operands = 1 : i64, tpu.core_type = #tpu.core_type<tc>, window_params = [{transform_indices = @transform_0, window_bounds = array<i64: 16, 32>}, {transform_indices = @transform_1, window_bounds = array<i64: 32, 32>}, {transform_indices = @transform_2, window_bounds = array<i64: 1, 32>}, {transform_indices = @transform_3, window_bounds = array<i64: 16, 32>}, {transform_indices = @transform_4, window_bounds = array<i64: 16, 32>}]} {
    %c0_i32 = arith.constant 0 : i32
    %0 = arith.cmpi eq, %arg2, %c0_i32 : i32
    %1 = arith.extui %0 : i1 to i32
    %c0_i32_0 = arith.constant 0 : i32
    %2 = arith.cmpi ne, %1, %c0_i32_0 : i32
    scf.if %2 {
      %cst_10 = arith.constant 0.000000e+00 : f32
      %12 = vector.broadcast %cst_10 : f32 to vector<16x32xf32>
      %c0_11 = arith.constant 0 : index
      %c0_12 = arith.constant 0 : index
      %13 = vector.load %arg8[%c0_11, %c0_12] : memref<16x32xf32, #tpu.memory_space<vmem>>, vector<16x32xf32>
      tpu.vector_store %arg8[%c0_11, %c0_12], %12 {strides = array<i32>} : memref<16x32xf32, #tpu.memory_space<vmem>>, vector<16x32xf32>,
    } else {
    }
    %c0 = arith.constant 0 : index
    %c0_1 = arith.constant 0 : index
    %3 = vector.load %arg8[%c0, %c0_1] : memref<16x32xf32, #tpu.memory_space<vmem>>, vector<16x32xf32>
    %c0_2 = arith.constant 0 : index
    %c0_3 = arith.constant 0 : index
    %4 = vector.load %arg3[%c0_2, %c0_3] : memref<16x32xbf16, #tpu.memory_space<vmem>>, vector<16x32xbf16>
    %c0_4 = arith.constant 0 : index
    %c0_5 = arith.constant 0 : index
    %5 = vector.load %arg4[%c0_4, %c0_5] : memref<32x32xbf16, #tpu.memory_space<vmem>>, vector<32x32xbf16>
    %cst = arith.constant dense<0.000000e+00> : vector<16x32xf32>
    %6 = tpu.matmul %4, %5, %cst {dimension_numbers = #tpu.dot_dimension_numbers<[1], [0], [0], [1], [0, 0, 1, 1], [], []>} : vector<16x32xbf16>, vector<32x32xbf16>, vector<16x32xf32> -> vector<16x32xf32>
    %7 = arith.addf %3, %6 : vector<16x32xf32>
    %c0_6 = arith.constant 0 : index
    %c0_7 = arith.constant 0 : index
    %8 = vector.load %arg8[%c0_6, %c0_7] : memref<16x32xf32, #tpu.memory_space<vmem>>, vector<16x32xf32>
    tpu.vector_store %arg8[%c0_6, %c0_7], %7 {strides = array<i32>} : memref<16x32xf32, #tpu.memory_space<vmem>>, vector<16x32xf32>,
    %c0_i32_8 = arith.constant 0 : i32
    %9 = arith.cmpi eq, %arg2, %c0_i32_8 : i32
    %10 = arith.extui %9 : i1 to i32
    %c0_i32_9 = arith.constant 0 : i32
    %11 = arith.cmpi ne, %10, %c0_i32_9 : i32
    scf.if %11 {
      %c0_10 = arith.constant 0 : index
      %c0_11 = arith.constant 0 : index
      %12 = vector.load %arg8[%c0_10, %c0_11] : memref<16x32xf32, #tpu.memory_space<vmem>>, vector<16x32xf32>
      %c0_12 = arith.constant 0 : index
      %c0_13 = arith.constant 0 : index
      %13 = vector.load %arg5[%c0_12, %c0_13] : memref<1x32xf32, #tpu.memory_space<vmem>>, vector<1x32xf32>
      %14 = vector.broadcast %13 : vector<1x32xf32> to vector<16x32xf32>
      %15 = arith.addf %12, %14 : vector<16x32xf32>
      %c0_14 = arith.constant 0 : index
      %c0_15 = arith.constant 0 : index
      %16 = vector.load %arg6[%c0_14, %c0_15] : memref<16x32xf32, #tpu.memory_space<vmem>>, vector<16x32xf32>
      %17 = arith.addf %15, %16 : vector<16x32xf32>
      %c0_16 = arith.constant 0 : index
      %c0_17 = arith.constant 0 : index
      %18 = vector.load %arg7[%c0_16, %c0_17] : memref<16x32xf32, #tpu.memory_space<vmem>>, vector<16x32xf32>
      tpu.vector_store %arg7[%c0_16, %c0_17], %17 {strides = array<i32>} : memref<16x32xf32, #tpu.memory_space<vmem>>, vector<16x32xf32>,
    } else {
    }
    return
  }
  func.func @transform_0(%arg0: i32, %arg1: i32, %arg2: i32) -> (i32, i32) {
    %c0_i32 = arith.constant 0 : i32
    return %arg0, %arg2 : i32, i32
  }
  func.func @transform_1(%arg0: i32, %arg1: i32, %arg2: i32) -> (i32, i32) {
    %c0_i32 = arith.constant 0 : i32
    return %arg2, %arg1 : i32, i32
  }
  func.func @transform_2(%arg0: i32, %arg1: i32, %arg2: i32) -> (i32, i32) {
    %c0_i32 = arith.constant 0 : i32
    %c0_i32_0 = arith.constant 0 : i32
    return %c0_i32, %arg1 : i32, i32
  }
  func.func @transform_3(%arg0: i32, %arg1: i32, %arg2: i32) -> (i32, i32) {
    %c0_i32 = arith.constant 0 : i32
    return %arg0, %arg1 : i32, i32
  }
  func.func @transform_4(%arg0: i32, %arg1: i32, %arg2: i32) -> (i32, i32) {
    %c0_i32 = arith.constant 0 : i32
    return %arg0, %arg1 : i32, i32
  }
}

module attributes {stable_mosaic.version = 11 : i64} {
  func.func @_matmul_kernel(%arg0: i32, %arg1: i32, %arg2: i32, %arg3: memref<16x32xbf16, #tpu.memory_space<vmem>>, %arg4: memref<32x128xbf16, #tpu.memory_space<vmem>>, %arg5: memref<1x128xf32, #tpu.memory_space<vmem>>, %arg6: memref<16x128xbf16, #tpu.memory_space<vmem>>, %arg7: memref<16x128xf32, #tpu.memory_space<vmem>>) attributes {dimension_semantics = [#tpu.dimension_semantics<parallel>, #tpu.dimension_semantics<parallel>, #tpu.dimension_semantics<arbitrary>], iteration_bounds = array<i64: 1, 1, 1>, scalar_prefetch = 0 : i64, scratch_operands = 1 : i64, tpu.core_type = #tpu.core_type<tc>, window_params = [{transform_indices = @transform_0, window_bounds = array<i64: 16, 32>}, {transform_indices = @transform_1, window_bounds = array<i64: 32, 128>}, {transform_indices = @transform_2, window_bounds = array<i64: 1, 128>}, {transform_indices = @transform_3, window_bounds = array<i64: 16, 128>}]} {
    %c0_i32 = arith.constant 0 : i32
    %0 = arith.cmpi eq, %arg2, %c0_i32 : i32
    %1 = arith.extui %0 : i1 to i32
    %c0_i32_0 = arith.constant 0 : i32
    %2 = arith.cmpi ne, %1, %c0_i32_0 : i32
    scf.if %2 {
      %cst_10 = arith.constant 0.000000e+00 : f32
      %12 = vector.broadcast %cst_10 : f32 to vector<16x128xf32>
      %c0_11 = arith.constant 0 : index
      %c0_12 = arith.constant 0 : index
      %13 = vector.load %arg7[%c0_11, %c0_12] : memref<16x128xf32, #tpu.memory_space<vmem>>, vector<16x128xf32>
      tpu.vector_store %arg7[%c0_11, %c0_12], %12 {strides = array<i32>} : memref<16x128xf32, #tpu.memory_space<vmem>>, vector<16x128xf32>,
    } else {
    }
    %c0 = arith.constant 0 : index
    %c0_1 = arith.constant 0 : index
    %3 = vector.load %arg7[%c0, %c0_1] : memref<16x128xf32, #tpu.memory_space<vmem>>, vector<16x128xf32>
    %c0_2 = arith.constant 0 : index
    %c0_3 = arith.constant 0 : index
    %4 = vector.load %arg3[%c0_2, %c0_3] : memref<16x32xbf16, #tpu.memory_space<vmem>>, vector<16x32xbf16>
    %c0_4 = arith.constant 0 : index
    %c0_5 = arith.constant 0 : index
    %5 = vector.load %arg4[%c0_4, %c0_5] : memref<32x128xbf16, #tpu.memory_space<vmem>>, vector<32x128xbf16>
    %cst = arith.constant dense<0.000000e+00> : vector<16x128xf32>
    %6 = tpu.matmul %4, %5, %cst {dimension_numbers = #tpu.dot_dimension_numbers<[1], [0], [0], [1], [0, 0, 1, 1], [], []>} : vector<16x32xbf16>, vector<32x128xbf16>, vector<16x128xf32> -> vector<16x128xf32>
    %7 = arith.addf %3, %6 : vector<16x128xf32>
    %c0_6 = arith.constant 0 : index
    %c0_7 = arith.constant 0 : index
    %8 = vector.load %arg7[%c0_6, %c0_7] : memref<16x128xf32, #tpu.memory_space<vmem>>, vector<16x128xf32>
    tpu.vector_store %arg7[%c0_6, %c0_7], %7 {strides = array<i32>} : memref<16x128xf32, #tpu.memory_space<vmem>>, vector<16x128xf32>,
    %c0_i32_8 = arith.constant 0 : i32
    %9 = arith.cmpi eq, %arg2, %c0_i32_8 : i32
    %10 = arith.extui %9 : i1 to i32
    %c0_i32_9 = arith.constant 0 : i32
    %11 = arith.cmpi ne, %10, %c0_i32_9 : i32
    scf.if %11 {
      %c0_10 = arith.constant 0 : index
      %c0_11 = arith.constant 0 : index
      %12 = vector.load %arg7[%c0_10, %c0_11] : memref<16x128xf32, #tpu.memory_space<vmem>>, vector<16x128xf32>
      %c0_12 = arith.constant 0 : index
      %c0_13 = arith.constant 0 : index
      %13 = vector.load %arg5[%c0_12, %c0_13] : memref<1x128xf32, #tpu.memory_space<vmem>>, vector<1x128xf32>
      %14 = vector.broadcast %13 : vector<1x128xf32> to vector<16x128xf32>
      %15 = arith.addf %12, %14 : vector<16x128xf32>
      %cst_14 = arith.constant 0.000000e+00 : f32
      %16 = vector.broadcast %cst_14 : f32 to vector<16x128xf32>
      %17 = arith.maximumf %15, %16 : vector<16x128xf32>
      %18 = arith.truncf %17 : vector<16x128xf32> to vector<16x128xbf16>
      %c0_15 = arith.constant 0 : index
      %c0_16 = arith.constant 0 : index
      %19 = vector.load %arg6[%c0_15, %c0_16] : memref<16x128xbf16, #tpu.memory_space<vmem>>, vector<16x128xbf16>
      tpu.vector_store %arg6[%c0_15, %c0_16], %18 {strides = array<i32>} : memref<16x128xbf16, #tpu.memory_space<vmem>>, vector<16x128xbf16>,
    } else {
    }
    return
  }
  func.func @transform_0(%arg0: i32, %arg1: i32, %arg2: i32) -> (i32, i32) {
    %c0_i32 = arith.constant 0 : i32
    return %arg0, %arg2 : i32, i32
  }
  func.func @transform_1(%arg0: i32, %arg1: i32, %arg2: i32) -> (i32, i32) {
    %c0_i32 = arith.constant 0 : i32
    return %arg2, %arg1 : i32, i32
  }
  func.func @transform_2(%arg0: i32, %arg1: i32, %arg2: i32) -> (i32, i32) {
    %c0_i32 = arith.constant 0 : i32
    %c0_i32_0 = arith.constant 0 : i32
    return %c0_i32, %arg1 : i32, i32
  }
  func.func @transform_3(%arg0: i32, %arg1: i32, %arg2: i32) -> (i32, i32) {
    %c0_i32 = arith.constant 0 : i32
    return %arg0, %arg1 : i32, i32
  }
}

module attributes {stable_mosaic.version = 11 : i64} {
  func.func @_matmul_res_kernel(%arg0: i32, %arg1: i32, %arg2: i32, %arg3: memref<16x128xbf16, #tpu.memory_space<vmem>>, %arg4: memref<128x32xbf16, #tpu.memory_space<vmem>>, %arg5: memref<1x32xf32, #tpu.memory_space<vmem>>, %arg6: memref<16x32xf32, #tpu.memory_space<vmem>>, %arg7: memref<16x32xf32, #tpu.memory_space<vmem>>, %arg8: memref<16x32xf32, #tpu.memory_space<vmem>>) attributes {dimension_semantics = [#tpu.dimension_semantics<parallel>, #tpu.dimension_semantics<parallel>, #tpu.dimension_semantics<arbitrary>], iteration_bounds = array<i64: 1, 1, 1>, scalar_prefetch = 0 : i64, scratch_operands = 1 : i64, tpu.core_type = #tpu.core_type<tc>, window_params = [{transform_indices = @transform_0, window_bounds = array<i64: 16, 128>}, {transform_indices = @transform_1, window_bounds = array<i64: 128, 32>}, {transform_indices = @transform_2, window_bounds = array<i64: 1, 32>}, {transform_indices = @transform_3, window_bounds = array<i64: 16, 32>}, {transform_indices = @transform_4, window_bounds = array<i64: 16, 32>}]} {
    %c0_i32 = arith.constant 0 : i32
    %0 = arith.cmpi eq, %arg2, %c0_i32 : i32
    %1 = arith.extui %0 : i1 to i32
    %c0_i32_0 = arith.constant 0 : i32
    %2 = arith.cmpi ne, %1, %c0_i32_0 : i32
    scf.if %2 {
      %cst_10 = arith.constant 0.000000e+00 : f32
      %12 = vector.broadcast %cst_10 : f32 to vector<16x32xf32>
      %c0_11 = arith.constant 0 : index
      %c0_12 = arith.constant 0 : index
      %13 = vector.load %arg8[%c0_11, %c0_12] : memref<16x32xf32, #tpu.memory_space<vmem>>, vector<16x32xf32>
      tpu.vector_store %arg8[%c0_11, %c0_12], %12 {strides = array<i32>} : memref<16x32xf32, #tpu.memory_space<vmem>>, vector<16x32xf32>,
    } else {
    }
    %c0 = arith.constant 0 : index
    %c0_1 = arith.constant 0 : index
    %3 = vector.load %arg8[%c0, %c0_1] : memref<16x32xf32, #tpu.memory_space<vmem>>, vector<16x32xf32>
    %c0_2 = arith.constant 0 : index
    %c0_3 = arith.constant 0 : index
    %4 = vector.load %arg3[%c0_2, %c0_3] : memref<16x128xbf16, #tpu.memory_space<vmem>>, vector<16x128xbf16>
    %c0_4 = arith.constant 0 : index
    %c0_5 = arith.constant 0 : index
    %5 = vector.load %arg4[%c0_4, %c0_5] : memref<128x32xbf16, #tpu.memory_space<vmem>>, vector<128x32xbf16>
    %cst = arith.constant dense<0.000000e+00> : vector<16x32xf32>
    %6 = tpu.matmul %4, %5, %cst {dimension_numbers = #tpu.dot_dimension_numbers<[1], [0], [0], [1], [0, 0, 1, 1], [], []>} : vector<16x128xbf16>, vector<128x32xbf16>, vector<16x32xf32> -> vector<16x32xf32>
    %7 = arith.addf %3, %6 : vector<16x32xf32>
    %c0_6 = arith.constant 0 : index
    %c0_7 = arith.constant 0 : index
    %8 = vector.load %arg8[%c0_6, %c0_7] : memref<16x32xf32, #tpu.memory_space<vmem>>, vector<16x32xf32>
    tpu.vector_store %arg8[%c0_6, %c0_7], %7 {strides = array<i32>} : memref<16x32xf32, #tpu.memory_space<vmem>>, vector<16x32xf32>,
    %c0_i32_8 = arith.constant 0 : i32
    %9 = arith.cmpi eq, %arg2, %c0_i32_8 : i32
    %10 = arith.extui %9 : i1 to i32
    %c0_i32_9 = arith.constant 0 : i32
    %11 = arith.cmpi ne, %10, %c0_i32_9 : i32
    scf.if %11 {
      %c0_10 = arith.constant 0 : index
      %c0_11 = arith.constant 0 : index
      %12 = vector.load %arg8[%c0_10, %c0_11] : memref<16x32xf32, #tpu.memory_space<vmem>>, vector<16x32xf32>
      %c0_12 = arith.constant 0 : index
      %c0_13 = arith.constant 0 : index
      %13 = vector.load %arg5[%c0_12, %c0_13] : memref<1x32xf32, #tpu.memory_space<vmem>>, vector<1x32xf32>
      %14 = vector.broadcast %13 : vector<1x32xf32> to vector<16x32xf32>
      %15 = arith.addf %12, %14 : vector<16x32xf32>
      %c0_14 = arith.constant 0 : index
      %c0_15 = arith.constant 0 : index
      %16 = vector.load %arg6[%c0_14, %c0_15] : memref<16x32xf32, #tpu.memory_space<vmem>>, vector<16x32xf32>
      %17 = arith.addf %15, %16 : vector<16x32xf32>
      %c0_16 = arith.constant 0 : index
      %c0_17 = arith.constant 0 : index
      %18 = vector.load %arg7[%c0_16, %c0_17] : memref<16x32xf32, #tpu.memory_space<vmem>>, vector<16x32xf32>
      tpu.vector_store %arg7[%c0_16, %c0_17], %17 {strides = array<i32>} : memref<16x32xf32, #tpu.memory_space<vmem>>, vector<16x32xf32>,
    } else {
    }
    return
  }
  func.func @transform_0(%arg0: i32, %arg1: i32, %arg2: i32) -> (i32, i32) {
    %c0_i32 = arith.constant 0 : i32
    return %arg0, %arg2 : i32, i32
  }
  func.func @transform_1(%arg0: i32, %arg1: i32, %arg2: i32) -> (i32, i32) {
    %c0_i32 = arith.constant 0 : i32
    return %arg2, %arg1 : i32, i32
  }
  func.func @transform_2(%arg0: i32, %arg1: i32, %arg2: i32) -> (i32, i32) {
    %c0_i32 = arith.constant 0 : i32
    %c0_i32_0 = arith.constant 0 : i32
    return %c0_i32, %arg1 : i32, i32
  }
  func.func @transform_3(%arg0: i32, %arg1: i32, %arg2: i32) -> (i32, i32) {
    %c0_i32 = arith.constant 0 : i32
    return %arg0, %arg1 : i32, i32
  }
  func.func @transform_4(%arg0: i32, %arg1: i32, %arg2: i32) -> (i32, i32) {
    %c0_i32 = arith.constant 0 : i32
    return %arg0, %arg1 : i32, i32
  }
}

module attributes {stable_mosaic.version = 11 : i64} {
  func.func @_matmul_kernel(%arg0: i32, %arg1: i32, %arg2: i32, %arg3: memref<16x32xbf16, #tpu.memory_space<vmem>>, %arg4: memref<32x16xbf16, #tpu.memory_space<vmem>>, %arg5: memref<1x16xf32, #tpu.memory_space<vmem>>, %arg6: memref<16x16xf32, #tpu.memory_space<vmem>>, %arg7: memref<16x16xf32, #tpu.memory_space<vmem>>) attributes {dimension_semantics = [#tpu.dimension_semantics<parallel>, #tpu.dimension_semantics<parallel>, #tpu.dimension_semantics<arbitrary>], iteration_bounds = array<i64: 1, 1, 1>, scalar_prefetch = 0 : i64, scratch_operands = 1 : i64, tpu.core_type = #tpu.core_type<tc>, window_params = [{transform_indices = @transform_0, window_bounds = array<i64: 16, 32>}, {transform_indices = @transform_1, window_bounds = array<i64: 32, 16>}, {transform_indices = @transform_2, window_bounds = array<i64: 1, 16>}, {transform_indices = @transform_3, window_bounds = array<i64: 16, 16>}]} {
    %c0_i32 = arith.constant 0 : i32
    %0 = arith.cmpi eq, %arg2, %c0_i32 : i32
    %1 = arith.extui %0 : i1 to i32
    %c0_i32_0 = arith.constant 0 : i32
    %2 = arith.cmpi ne, %1, %c0_i32_0 : i32
    scf.if %2 {
      %cst_10 = arith.constant 0.000000e+00 : f32
      %12 = vector.broadcast %cst_10 : f32 to vector<16x16xf32>
      %c0_11 = arith.constant 0 : index
      %c0_12 = arith.constant 0 : index
      %13 = vector.load %arg7[%c0_11, %c0_12] : memref<16x16xf32, #tpu.memory_space<vmem>>, vector<16x16xf32>
      tpu.vector_store %arg7[%c0_11, %c0_12], %12 {strides = array<i32>} : memref<16x16xf32, #tpu.memory_space<vmem>>, vector<16x16xf32>,
    } else {
    }
    %c0 = arith.constant 0 : index
    %c0_1 = arith.constant 0 : index
    %3 = vector.load %arg7[%c0, %c0_1] : memref<16x16xf32, #tpu.memory_space<vmem>>, vector<16x16xf32>
    %c0_2 = arith.constant 0 : index
    %c0_3 = arith.constant 0 : index
    %4 = vector.load %arg3[%c0_2, %c0_3] : memref<16x32xbf16, #tpu.memory_space<vmem>>, vector<16x32xbf16>
    %c0_4 = arith.constant 0 : index
    %c0_5 = arith.constant 0 : index
    %5 = vector.load %arg4[%c0_4, %c0_5] : memref<32x16xbf16, #tpu.memory_space<vmem>>, vector<32x16xbf16>
    %cst = arith.constant dense<0.000000e+00> : vector<16x16xf32>
    %6 = tpu.matmul %4, %5, %cst {dimension_numbers = #tpu.dot_dimension_numbers<[1], [0], [0], [1], [0, 0, 1, 1], [], []>} : vector<16x32xbf16>, vector<32x16xbf16>, vector<16x16xf32> -> vector<16x16xf32>
    %7 = arith.addf %3, %6 : vector<16x16xf32>
    %c0_6 = arith.constant 0 : index
    %c0_7 = arith.constant 0 : index
    %8 = vector.load %arg7[%c0_6, %c0_7] : memref<16x16xf32, #tpu.memory_space<vmem>>, vector<16x16xf32>
    tpu.vector_store %arg7[%c0_6, %c0_7], %7 {strides = array<i32>} : memref<16x16xf32, #tpu.memory_space<vmem>>, vector<16x16xf32>,
    %c0_i32_8 = arith.constant 0 : i32
    %9 = arith.cmpi eq, %arg2, %c0_i32_8 : i32
    %10 = arith.extui %9 : i1 to i32
    %c0_i32_9 = arith.constant 0 : i32
    %11 = arith.cmpi ne, %10, %c0_i32_9 : i32
    scf.if %11 {
      %c0_10 = arith.constant 0 : index
      %c0_11 = arith.constant 0 : index
      %12 = vector.load %arg7[%c0_10, %c0_11] : memref<16x16xf32, #tpu.memory_space<vmem>>, vector<16x16xf32>
      %c0_12 = arith.constant 0 : index
      %c0_13 = arith.constant 0 : index
      %13 = vector.load %arg5[%c0_12, %c0_13] : memref<1x16xf32, #tpu.memory_space<vmem>>, vector<1x16xf32>
      %14 = vector.broadcast %13 : vector<1x16xf32> to vector<16x16xf32>
      %15 = arith.addf %12, %14 : vector<16x16xf32>
      %c0_14 = arith.constant 0 : index
      %c0_15 = arith.constant 0 : index
      %16 = vector.load %arg6[%c0_14, %c0_15] : memref<16x16xf32, #tpu.memory_space<vmem>>, vector<16x16xf32>
      tpu.vector_store %arg6[%c0_14, %c0_15], %15 {strides = array<i32>} : memref<16x16xf32, #tpu.memory_space<vmem>>, vector<16x16xf32>,
    } else {
    }
    return
  }
  func.func @transform_0(%arg0: i32, %arg1: i32, %arg2: i32) -> (i32, i32) {
    %c0_i32 = arith.constant 0 : i32
    return %arg0, %arg2 : i32, i32
  }
  func.func @transform_1(%arg0: i32, %arg1: i32, %arg2: i32) -> (i32, i32) {
    %c0_i32 = arith.constant 0 : i32
    return %arg2, %arg1 : i32, i32
  }
  func.func @transform_2(%arg0: i32, %arg1: i32, %arg2: i32) -> (i32, i32) {
    %c0_i32 = arith.constant 0 : i32
    %c0_i32_0 = arith.constant 0 : i32
    return %c0_i32, %arg1 : i32, i32
  }
  func.func @transform_3(%arg0: i32, %arg1: i32, %arg2: i32) -> (i32, i32) {
    %c0_i32 = arith.constant 0 : i32
    return %arg0, %arg1 : i32, i32
  }
}

</mosaic_0001>

<llo_original>
// kernel: transformer_forward.19
$region0: #{transformer_forward.19}
  #allocation0 [shape = 'u32[]', space=smem, size = 0x4, offset = 0x4, fixed_abs, tag = 'smem constant byte address 0x4 - core index']
  #allocation1 [shape = 'u32[144,128]{1,0:T(1,128)}', space=vmem, size = 0x12000, scoped, tag = 'internal scratch']
  #allocation2 [shape = 'f32[16,96]{1,0:T(8,128)}', space=vmem, size = 0x2000, scoped, tag = 'scratch operand']
  %s0 = inlined_call_operand.vmem [shape: bf16[16,32], index: 0, kind: input, shape index: {}]
  %s1 = inlined_call_operand.vmem [shape: bf16[32,96], index: 1, kind: input, shape index: {}]
  %s2 = inlined_call_operand.vmem [shape: f32[1,96], index: 2, kind: input, shape index: {}]
  %s3 = inlined_call_operand.vmem [shape: bf16[16,96], index: 3, kind: output, shape index: {}]
  %s4 = sld [smem:[#allocation0]]
  $region30: #{transformer_forward.19} parent=0
    _
  %s6 = ssub.s32 1, %s4
  %s7 = scalar_select 0, %s6, %s4
  // Predicated region
  $region2: #{transformer_forward.19} parent=0 // pred_check
    _
  $region3: #{transformer_forward.19} parent=0 // pred_check_branch
    %9 = sbr.rel (0) target = $region5
  $region4: #{transformer_forward.19} parent=0 // pred_region
    _
  $region5: #{transformer_forward.19} parent=0 // pred_fallthru
    _
  // Predicated region
  $region6: #{transformer_forward.19} parent=0 // pred_check
    _
  $region7: #{transformer_forward.19} parent=0 // pred_check_branch
    %11 = sbr.rel (0) target = $region9
  $region8: #{transformer_forward.19} parent=0 // pred_region
    _
  $region9: #{transformer_forward.19} parent=0 // pred_fallthru
    _
  // Predicated region
  $region10: #{transformer_forward.19} parent=0 // pred_check
    _
  $region11: #{transformer_forward.19} parent=0 // pred_check_branch
    %13 = sbr.rel (0) target = $region13
  $region12: #{transformer_forward.19} parent=0 // pred_region
    _
  $region13: #{transformer_forward.19} parent=0 // pred_fallthru
    _
  %p15 = scmp.eq.s32.totalorder 0, 0
  // Predicated region
  $region14: #{transformer_forward.19} parent=0 // pred_check
    %p16 = pneg %p15
  $region15: #{transformer_forward.19} parent=0 // pred_check_branch
    %18 = sbr.rel (%p16) target = $region17
  $region16: #{transformer_forward.19} parent=0 // pred_region
    %vm19 = vcmask 785408
    %20 = vst.msk [vmem:[#allocation2] sm:$0xff] %vm19, 0.0
    %21 = vst.msk [vmem:[#allocation2 + $0x8] sm:$0xff] %vm19, 0.0
  $region17: #{transformer_forward.19} parent=0 // pred_fallthru
    _
  %v22 = vld [vmem:[#allocation2] sm:$0xff]
  %v23 = vld [vmem:[#allocation2 + $0x8] sm:$0xff]
  %v24 = vld [vmem:[%s0] sm:$0xf]
  %v25 = vld [vmem:[%s0 + $0x4] sm:$0xf]
  %v26 = vld [vmem:[%s1] sm:$0xf]
  %v27 = vld [vmem:[%s1 + $0x4] sm:$0xf]
  %v28 = vld [vmem:[%s1 + $0x8] sm:$0xf]
  %v29 = vld [vmem:[%s1 + $0xc] sm:$0xf]
  %v32 = vunpack.c.l.b16 %v24
  %v33 = vunpack.c.l.b16 %v25
  %v34 = vpack.c.b16 %v33, %v32
  %v39 = vunpack.c.l.b16 %v26
  %v40 = vunpack.c.l.b16 %v27
  %v41 = vunpack.c.l.b16 %v28
  %v42 = vunpack.c.l.b16 %v29
  %v43 = vpack.c.b16 %v40, %v39
  %v44 = vpack.c.b16 %v42, %v41
  %vm47 = vcmask 261120
  %v49 = vsel %vm47, %v34, 0
  %51 = vmatprep.subr.bf16.mxu0 0
  %52 = vmatpush1.bf16.msra.mxu0 %v43
  %53 = vmatprep.subr.bf16.mxu0 0
  %54 = vmatpush1.bf16.msra.mxu0 %v44
  %55 = vmatprep.subr.bf16.mxu0 0
  %56 = vmatpush1.bf16.msra.mxu0 0
  %57 = vmatprep.subr.bf16.mxu0 0
  %58 = vmatpush1.bf16.msra.mxu0 0
  %59 = vmatprep.subr.bf16.mxu0 0
  %60 = vmatpush1.bf16.msra.mxu0 0
  %61 = vmatprep.subr.bf16.mxu0 0
  %62 = vmatpush1.bf16.msra.mxu0 0
  %63 = vmatprep.subr.bf16.mxu0 0
  %64 = vmatpush1.bf16.msra.mxu0 0
  %65 = vmatprep.subr.bf16.mxu0 0
  %66 = vmatpush1.bf16.msra.mxu0 0
  %67 = vmatprep.subr.bf16.mxu0 0
  %68 = vmatpush1.bf16.msra.mxu0 0
  %69 = vmatprep.subr.bf16.mxu0 0
  %70 = vmatpush1.bf16.msra.mxu0 0
  %71 = vmatprep.subr.bf16.mxu0 0
  %72 = vmatpush1.bf16.msra.mxu0 0
  %73 = vmatprep.subr.bf16.mxu0 0
  %74 = vmatpush1.bf16.msra.mxu0 0
  %75 = vmatprep.subr.bf16.mxu0 0
  %76 = vmatpush1.bf16.msra.mxu0 0
  %77 = vmatprep.subr.bf16.mxu0 0
  %78 = vmatpush1.bf16.msra.mxu0 0
  %79 = vmatprep.subr.bf16.mxu0 0
  %80 = vmatpush1.bf16.msra.mxu0 0
  %81 = vmatprep.subr.bf16.mxu0 0
  %82 = vmatpush1.bf16.msra.mxu0 0
  %83 = vmatprep.mubr.bf16.mxu0 0
  %84 = vmatmul.mubr.bf16.gmra.mrb[0].mxu0 %v49
  %v85 = vpop.f32.mrb[0].mxu0
  %v86 = vadd.f32 0.0, %v85
  %v87 = vpop.f32.mrb[0].mxu0
  %v88 = vpop.f32.mrb[0].mxu0
  %v89 = vadd.f32 0.0, %v88
  %v90 = vpop.f32.mrb[0].mxu0
  %91 = vdwg.mxu0
  %v92 = vadd.f32 %v22, %v86
  %v93 = vadd.f32 %v23, %v89
  %vm94 = vcmask 785408
  %95 = vst.msk [vmem:[#allocation2] sm:$0xff] %vm94, %v92
  %96 = vst.msk [vmem:[#allocation2 + $0x8] sm:$0xff] %vm94, %v93
  // Predicated region
  $region18: #{transformer_forward.19} parent=0 // pred_check
    %p97 = pneg %p15
  $region19: #{transformer_forward.19} parent=0 // pred_check_branch
    %99 = sbr.rel (%p97) target = $region21
  $region20: #{transformer_forward.19} parent=0 // pred_region
    %v100 = vld [vmem:[#allocation2] sm:$0xff]
    %v101 = vld [vmem:[#allocation2 + $0x8] sm:$0xff]
    %v102 = vld [vmem:[%s2] sm:$0x1]
    %v104 = vlaneseq
    %v105 = vshrl.u32 %v104, 7
    %v106 = vsub.s32 0, %v105
    %v107 = vrot.slane %v102, %v106
    %v109 = vadd.f32 %v100, %v107
    %v110 = vadd.f32 %v101, %v107
    %v111 = vpack.c.bf16 %v110, %v109
    %v113 = vunpack.c.l.b16 %v111
    %v114 = vunpack.c.h.b16 %v111
    %v115 = vpack.c.b16 %v113, %v113
    %v116 = vpack.c.b16 %v114, %v114
    %vm119 = vcmask 781312
    %120 = vst.msk [vmem:[%s3] sm:$0xf] %vm119, %v115
    %121 = vst.msk [vmem:[%s3 + $0x4] sm:$0xf] %vm119, %v116
  $region21: #{transformer_forward.19} parent=0 // pred_fallthru
    _
  // Predicated region
  $region22: #{transformer_forward.19} parent=0 // pred_check
    _
  $region23: #{transformer_forward.19} parent=0 // pred_check_branch
    %123 = sbr.rel (0) target = $region25
  $region24: #{transformer_forward.19} parent=0 // pred_region
    _
  $region25: #{transformer_forward.19} parent=0 // pred_fallthru
    _
  // Predicated region
  $region26: #{transformer_forward.19} parent=0 // pred_check
    _
  $region27: #{transformer_forward.19} parent=0 // pred_check_branch
    %125 = sbr.rel (0) target = $region29
  $region28: #{transformer_forward.19} parent=0 // pred_region
    _
  $region29: #{transformer_forward.19} parent=0 // pred_fallthru
    _

// kernel: transformer_forward.17
$region0: #{transformer_forward.17}
  #allocation0 [shape = 'u32[]', space=smem, size = 0x4, offset = 0x4, fixed_abs, tag = 'smem constant byte address 0x4 - core index']
  #allocation1 [shape = 'u32[144,128]{1,0:T(1,128)}', space=vmem, size = 0x12000, scoped, tag = 'internal scratch']
  #allocation2 [shape = 'f32[16,32]{1,0:T(8,128)}', space=vmem, size = 0x2000, scoped, tag = 'scratch operand']
  %s0 = inlined_call_operand.vmem [shape: f32[16,64], index: 0, kind: input, shape index: {}]
  %s1 = inlined_call_operand.vmem [shape: bf16[64,32], index: 1, kind: input, shape index: {}]
  %s2 = inlined_call_operand.vmem [shape: f32[1,32], index: 2, kind: input, shape index: {}]
  %s3 = inlined_call_operand.vmem [shape: f32[16,32], index: 3, kind: output, shape index: {}]
  %s4 = sld [smem:[#allocation0]]
  $region30: #{transformer_forward.17} parent=0
    _
  %s6 = ssub.s32 1, %s4
  %s7 = scalar_select 0, %s6, %s4
  // Predicated region
  $region2: #{transformer_forward.17} parent=0 // pred_check
    _
  $region3: #{transformer_forward.17} parent=0 // pred_check_branch
    %9 = sbr.rel (0) target = $region5
  $region4: #{transformer_forward.17} parent=0 // pred_region
    _
  $region5: #{transformer_forward.17} parent=0 // pred_fallthru
    _
  // Predicated region
  $region6: #{transformer_forward.17} parent=0 // pred_check
    _
  $region7: #{transformer_forward.17} parent=0 // pred_check_branch
    %11 = sbr.rel (0) target = $region9
  $region8: #{transformer_forward.17} parent=0 // pred_region
    _
  $region9: #{transformer_forward.17} parent=0 // pred_fallthru
    _
  // Predicated region
  $region10: #{transformer_forward.17} parent=0 // pred_check
    _
  $region11: #{transformer_forward.17} parent=0 // pred_check_branch
    %13 = sbr.rel (0) target = $region13
  $region12: #{transformer_forward.17} parent=0 // pred_region
    _
  $region13: #{transformer_forward.17} parent=0 // pred_fallthru
    _
  %p15 = scmp.eq.s32.totalorder 0, 0
  // Predicated region
  $region14: #{transformer_forward.17} parent=0 // pred_check
    %p16 = pneg %p15
  $region15: #{transformer_forward.17} parent=0 // pred_check_branch
    %18 = sbr.rel (%p16) target = $region17
  $region16: #{transformer_forward.17} parent=0 // pred_region
    %vm19 = vcmask 261120
    %20 = vst.msk [vmem:[#allocation2] sm:$0xff] %vm19, 0.0
    %21 = vst.msk [vmem:[#allocation2 + $0x8] sm:$0xff] %vm19, 0.0
  $region17: #{transformer_forward.17} parent=0 // pred_fallthru
    _
  %v22 = vld [vmem:[#allocation2] sm:$0xff]
  %v23 = vld [vmem:[#allocation2 + $0x8] sm:$0xff]
  %v24 = vld [vmem:[%s0] sm:$0xff]
  %v25 = vld [vmem:[%s0 + $0x8] sm:$0xff]
  %v26 = vpack.c.bf16 %v25, %v24
  %v27 = vld [vmem:[%s1] sm:$0xf]
  %v28 = vld [vmem:[%s1 + $0x4] sm:$0xf]
  %v29 = vld [vmem:[%s1 + $0x8] sm:$0xf]
  %v30 = vld [vmem:[%s1 + $0xc] sm:$0xf]
  %v31 = vld [vmem:[%s1 + $0x10] sm:$0xf]
  %v32 = vld [vmem:[%s1 + $0x14] sm:$0xf]
  %v33 = vld [vmem:[%s1 + $0x18] sm:$0xf]
  %v34 = vld [vmem:[%s1 + $0x1c] sm:$0xf]
  %v43 = vunpack.c.l.b16 %v27
  %v44 = vunpack.c.l.b16 %v28
  %v45 = vunpack.c.l.b16 %v29
  %v46 = vunpack.c.l.b16 %v30
  %v47 = vunpack.c.l.b16 %v31
  %v48 = vunpack.c.l.b16 %v32
  %v49 = vunpack.c.l.b16 %v33
  %v50 = vunpack.c.l.b16 %v34
  %v51 = vpack.c.b16 %v44, %v43
  %v52 = vpack.c.b16 %v46, %v45
  %v53 = vpack.c.b16 %v48, %v47
  %v54 = vpack.c.b16 %v50, %v49
  %vm59 = vcmask 523264
  %v61 = vsel %vm59, %v26, 0
  %63 = vmatprep.subr.bf16.mxu0 0
  %64 = vmatpush1.bf16.msra.mxu0 %v51
  %65 = vmatprep.subr.bf16.mxu0 0
  %66 = vmatpush1.bf16.msra.mxu0 %v52
  %67 = vmatprep.subr.bf16.mxu0 0
  %68 = vmatpush1.bf16.msra.mxu0 %v53
  %69 = vmatprep.subr.bf16.mxu0 0
  %70 = vmatpush1.bf16.msra.mxu0 %v54
  %71 = vmatprep.subr.bf16.mxu0 0
  %72 = vmatpush1.bf16.msra.mxu0 0
  %73 = vmatprep.subr.bf16.mxu0 0
  %74 = vmatpush1.bf16.msra.mxu0 0
  %75 = vmatprep.subr.bf16.mxu0 0
  %76 = vmatpush1.bf16.msra.mxu0 0
  %77 = vmatprep.subr.bf16.mxu0 0
  %78 = vmatpush1.bf16.msra.mxu0 0
  %79 = vmatprep.subr.bf16.mxu0 0
  %80 = vmatpush1.bf16.msra.mxu0 0
  %81 = vmatprep.subr.bf16.mxu0 0
  %82 = vmatpush1.bf16.msra.mxu0 0
  %83 = vmatprep.subr.bf16.mxu0 0
  %84 = vmatpush1.bf16.msra.mxu0 0
  %85 = vmatprep.subr.bf16.mxu0 0
  %86 = vmatpush1.bf16.msra.mxu0 0
  %87 = vmatprep.subr.bf16.mxu0 0
  %88 = vmatpush1.bf16.msra.mxu0 0
  %89 = vmatprep.subr.bf16.mxu0 0
  %90 = vmatpush1.bf16.msra.mxu0 0
  %91 = vmatprep.subr.bf16.mxu0 0
  %92 = vmatpush1.bf16.msra.mxu0 0
  %93 = vmatprep.subr.bf16.mxu0 0
  %94 = vmatpush1.bf16.msra.mxu0 0
  %95 = vmatprep.mubr.bf16.mxu0 0
  %96 = vmatmul.mubr.bf16.gmra.mrb[0].mxu0 %v61
  %v97 = vpop.f32.mrb[0].mxu0
  %v98 = vadd.f32 0.0, %v97
  %v99 = vpop.f32.mrb[0].mxu0
  %v100 = vpop.f32.mrb[0].mxu0
  %v101 = vadd.f32 0.0, %v100
  %v102 = vpop.f32.mrb[0].mxu0
  %103 = vdwg.mxu0
  %v104 = vadd.f32 %v22, %v98
  %v105 = vadd.f32 %v23, %v101
  %vm106 = vcmask 261120
  %107 = vst.msk [vmem:[#allocation2] sm:$0xff] %vm106, %v104
  %108 = vst.msk [vmem:[#allocation2 + $0x8] sm:$0xff] %vm106, %v105
  // Predicated region
  $region18: #{transformer_forward.17} parent=0 // pred_check
    %p109 = pneg %p15
  $region19: #{transformer_forward.17} parent=0 // pred_check_branch
    %111 = sbr.rel (%p109) target = $region21
  $region20: #{transformer_forward.17} parent=0 // pred_region
    %v112 = vld [vmem:[#allocation2] sm:$0xff]
    %v113 = vld [vmem:[#allocation2 + $0x8] sm:$0xff]
    %v114 = vld [vmem:[%s2] sm:$0x1]
    %v116 = vlaneseq
    %v117 = vshrl.u32 %v116, 7
    %v118 = vsub.s32 0, %v117
    %v119 = vrot.slane %v114, %v118
    %v121 = vadd.f32 %v112, %v119
    %v122 = vadd.f32 %v113, %v119
    %123 = vst.msk [vmem:[%s3] sm:$0xff] %vm106, %v121
    %124 = vst.msk [vmem:[%s3 + $0x8] sm:$0xff] %vm106, %v122
  $region21: #{transformer_forward.17} parent=0 // pred_fallthru
    _
  // Predicated region
  $region22: #{transformer_forward.17} parent=0 // pred_check
    _
  $region23: #{transformer_forward.17} parent=0 // pred_check_branch
    %126 = sbr.rel (0) target = $region25
  $region24: #{transformer_forward.17} parent=0 // pred_region
    _
  $region25: #{transformer_forward.17} parent=0 // pred_fallthru
    _
  // Predicated region
  $region26: #{transformer_forward.17} parent=0 // pred_check
    _
  $region27: #{transformer_forward.17} parent=0 // pred_check_branch
    %128 = sbr.rel (0) target = $region29
  $region28: #{transformer_forward.17} parent=0 // pred_region
    _
  $region29: #{transformer_forward.17} parent=0 // pred_fallthru
    _

// kernel: transformer_forward.18
$region0: #{transformer_forward.18}
  #allocation0 [shape = 'u32[]', space=smem, size = 0x4, offset = 0x4, fixed_abs, tag = 'smem constant byte address 0x4 - core index']
  #allocation1 [shape = 'u32[144,128]{1,0:T(1,128)}', space=vmem, size = 0x12000, scoped, tag = 'internal scratch']
  %s0 = inlined_call_operand.vmem [shape: f32[16,32], index: 0, kind: input, shape index: {}]
  %s1 = inlined_call_operand.vmem [shape: f32[1,32], index: 1, kind: input, shape index: {}]
  %s2 = inlined_call_operand.vmem [shape: f32[1,32], index: 2, kind: input, shape index: {}]
  %s3 = inlined_call_operand.vmem [shape: bf16[16,32], index: 3, kind: output, shape index: {}]
  %s4 = sld [smem:[#allocation0]]
  $region22: #{transformer_forward.18} parent=0
    _
  %s6 = ssub.s32 1, %s4
  %s7 = scalar_select 0, %s6, %s4
  // Predicated region
  $region2: #{transformer_forward.18} parent=0 // pred_check
    _
  $region3: #{transformer_forward.18} parent=0 // pred_check_branch
    %9 = sbr.rel (0) target = $region5
  $region4: #{transformer_forward.18} parent=0 // pred_region
    _
  $region5: #{transformer_forward.18} parent=0 // pred_fallthru
    _
  // Predicated region
  $region6: #{transformer_forward.18} parent=0 // pred_check
    _
  $region7: #{transformer_forward.18} parent=0 // pred_check_branch
    %11 = sbr.rel (0) target = $region9
  $region8: #{transformer_forward.18} parent=0 // pred_region
    _
  $region9: #{transformer_forward.18} parent=0 // pred_fallthru
    _
  // Predicated region
  $region10: #{transformer_forward.18} parent=0 // pred_check
    _
  $region11: #{transformer_forward.18} parent=0 // pred_check_branch
    %13 = sbr.rel (0) target = $region13
  $region12: #{transformer_forward.18} parent=0 // pred_region
    _
  $region13: #{transformer_forward.18} parent=0 // pred_fallthru
    _
  %v14 = vld [vmem:[%s0] sm:$0xff]
  %v15 = vld [vmem:[%s0 + $0x8] sm:$0xff]
  %vm16 = vcmask 261120
  %v17 = vsel %vm16, %v14, 0.0
  %18 = vadd.xlane.f32.xlu0 %v17
  %v19 = vpop.xlane.xlu0 %18
  %v20 = vsel %vm16, %v15, 0.0
  %21 = vadd.xlane.f32.xlu0 %v20
  %v22 = vpop.xlane.xlu0 %21
  %v23 = vrcp.pop 32.0
  %v24 = vmul.f32 %v19, %v23
  %v25 = vmul.f32 %v22, %v23
  %v26 = vsub.f32 %v14, %v24
  %v27 = vsub.f32 %v15, %v25
  %v28 = vmul.f32 %v26, %v26
  %v29 = vmul.f32 %v27, %v27
  %v30 = vsel %vm16, %v28, 0.0
  %31 = vadd.xlane.f32.xlu0 %v30
  %v32 = vpop.xlane.xlu0 %31
  %v33 = vsel %vm16, %v29, 0.0
  %34 = vadd.xlane.f32.xlu0 %v33
  %v35 = vpop.xlane.xlu0 %34
  %v36 = vmul.f32 %v32, 0.032258064
  %v37 = vmul.f32 %v35, 0.032258064
  %v38 = vrsqrt.pop %v36
  %v39 = vmul.f32 %v36, %v38
  %vm40 = vcmp.eq.f32.partialorder %v36, inf
  %v41 = vsel %vm40, %v36, %v39
  %vm42 = vcmp.eq.f32.partialorder %v36, 0.0
  %v43 = vand.u32 %v36, 2147483648
  %v44 = vsel %vm42, %v43, %v41
  %v45 = vrsqrt.pop %v37
  %v46 = vmul.f32 %v37, %v45
  %vm47 = vcmp.eq.f32.partialorder %v37, inf
  %v48 = vsel %vm47, %v37, %v46
  %vm49 = vcmp.eq.f32.partialorder %v37, 0.0
  %v50 = vand.u32 %v37, 2147483648
  %v51 = vsel %vm49, %v50, %v48
  %v52 = vadd.f32 %v44, 1e-06
  %v53 = vadd.f32 %v51, 1e-06
  %v54 = vrcp.pop %v52
  %v55 = vrcp.pop %v53
  %v56 = vld [vmem:[%s1] sm:$0x1]
  %v58 = vlaneseq
  %v59 = vshrl.u32 %v58, 7
  %v60 = vsub.s32 0, %v59
  %v61 = vrot.slane %v56, %v60
  %v63 = vmul.f32 %v61, %v26
  %v64 = vmul.f32 %v61, %v27
  %v65 = vmul.f32 %v63, %v54
  %v66 = vmul.f32 %v64, %v55
  %v67 = vld [vmem:[%s2] sm:$0x1]
  %v69 = vlaneseq
  %v70 = vshrl.u32 %v69, 7
  %v71 = vsub.s32 0, %v70
  %v72 = vrot.slane %v67, %v71
  %v74 = vadd.f32 %v65, %v72
  %v75 = vadd.f32 %v66, %v72
  %v76 = vpack.c.bf16 %v75, %v74
  %v78 = vunpack.c.l.b16 %v76
  %v79 = vunpack.c.h.b16 %v76
  %v80 = vpack.c.b16 %v78, %v78
  %v81 = vpack.c.b16 %v79, %v79
  %vm84 = vcmask 257024
  %85 = vst.msk [vmem:[%s3] sm:$0xf] %vm84, %v80
  %86 = vst.msk [vmem:[%s3 + $0x4] sm:$0xf] %vm84, %v81
  // Predicated region
  $region14: #{transformer_forward.18} parent=0 // pred_check
    _
  $region15: #{transformer_forward.18} parent=0 // pred_check_branch
    %88 = sbr.rel (0) target = $region17
  $region16: #{transformer_forward.18} parent=0 // pred_region
    _
  $region17: #{transformer_forward.18} parent=0 // pred_fallthru
    _
  // Predicated region
  $region18: #{transformer_forward.18} parent=0 // pred_check
    _
  $region19: #{transformer_forward.18} parent=0 // pred_check_branch
    %90 = sbr.rel (0) target = $region21
  $region20: #{transformer_forward.18} parent=0 // pred_region
    _
  $region21: #{transformer_forward.18} parent=0 // pred_fallthru
    _

// kernel: transformer_forward.20
$region0: #{transformer_forward.20}
  #allocation0 [shape = 'u32[]', space=smem, size = 0x4, offset = 0x4, fixed_abs, tag = 'smem constant byte address 0x4 - core index']
  #allocation1 [shape = 'u32[144,128]{1,0:T(1,128)}', space=vmem, size = 0x12000, scoped, tag = 'internal scratch']
  %s0 = inlined_call_operand.vmem [shape: bf16[2,8,96], index: 0, kind: input, shape index: {}]
  %s1 = inlined_call_operand.vmem [shape: s32[2,8,8], index: 1, kind: input, shape index: {}]
  %s2 = inlined_call_operand.vmem [shape: bf16[2,8,32], index: 2, kind: output, shape index: {}]
  %s3 = sld [smem:[#allocation0]]
  $region41: #{transformer_forward.20} parent=0
    _
  %s5 = ssub.s32 1, %s3
  %s6 = scalar_select 0, %s5, %s3
  loop: start=0, step=1, limit=4
  $region2: #{transformer_forward.20} parent=0 // loop_pre_header
    _
  $region3: #{transformer_forward.20} parent=0 // loop_header
    %s8 = sphi 0, %s12
    %p9 = scmp.ge.s32.totalorder %s8, 4
    %s15 = sphi 0, %s27
    %s16 = sphi 0, %s23
    %s17 = sphi 0, %s15
    %s18 = sphi 0, %s16
    %s19 = sphi 0, %s17
    %s20 = sphi 0, %s18
    %s30 = sphi 0, %s32
    %s33 = sphi 0, %s30
    %s34 = sphi 0, %s33
    %s50 = sphi 0, %s34
    %s58 = sphi 0, %s60
    %s61 = sphi 0, %s58
    %s62 = sphi 0, %s61
    %s78 = sphi 0, %s62
    %s86 = sphi 0, %s88
    %s89 = sphi 0, %s86
    %s90 = sphi 0, %s89
    %s106 = sphi 0, %s90
  $region4: #{transformer_forward.20} parent=0 // loop_header_branch
    %11 = sbr.rel (%p9) target = $region8
  $region5: #{transformer_forward.20} parent=0 // loop_body
    %s13 = ssub.s32 %s8, 1
    %s14 = ssub.s32 %s8, 2
    %s21 = sadd.s32 1, %s16
    %p22 = scmp.ge.s32.totalorder %s21, 1
    %s23 = scalar_select %p22, 0, %s21
    %s24 = sadd.s32 1, %s15
    %s25 = scalar_select %p22, %s24, %s15
    %p26 = scmp.ge.s32.totalorder %s25, 2
    %s27 = scalar_select %p26, 0, %s25
    %s28 = ssub.s32 %s15, %s27
    %p29 = scmp.eq.s32.totalorder %s28, 0
    %s31 = sadd.s32 %s30, 1
    %s32 = scalar_select %p29, %s30, %s31
    %p35 = pneg %p29
    %p36 = scmp.eq.s32.totalorder %s8, 1
    %p37 = por %p35, %p36
    %p38 = scmp.ne.s32.totalorder %s30, %s33
    %p39 = scmp.eq.s32.totalorder %s8, 0
    %p40 = por %p38, %p39
    %p41 = scmp.ne.s32.totalorder %s30, %s33
    %p42 = scmp.eq.s32.totalorder %s13, 1
    %p43 = por %p41, %p42
    %p44 = scmp.ne.s32.totalorder %s33, %s34
    %p45 = scmp.eq.s32.totalorder %s13, 0
    %p46 = por %p44, %p45
    %p47 = scmp.ne.s32.totalorder %s33, %s34
    %p48 = scmp.eq.s32.totalorder %s14, 1
    %p49 = por %p47, %p48
    %p51 = scmp.ne.s32.totalorder %s34, %s50
    %p52 = scmp.eq.s32.totalorder %s14, 0
    %p53 = por %p51, %p52
    %s54 = ssub.s32 %s15, %s27
    %s55 = ssub.s32 %s16, %s23
    %s56 = sor.u32 %s54, %s55
    %p57 = scmp.eq.s32.totalorder %s56, 0
    %s59 = sadd.s32 %s58, 1
    %s60 = scalar_select %p57, %s58, %s59
    %p63 = pneg %p57
    %p64 = scmp.eq.s32.totalorder %s8, 1
    %p65 = por %p63, %p64
    %p66 = scmp.ne.s32.totalorder %s58, %s61
    %p67 = scmp.eq.s32.totalorder %s8, 0
    %p68 = por %p66, %p67
    %p69 = scmp.ne.s32.totalorder %s58, %s61
    %p70 = scmp.eq.s32.totalorder %s13, 1
    %p71 = por %p69, %p70
    %p72 = scmp.ne.s32.totalorder %s61, %s62
    %p73 = scmp.eq.s32.totalorder %s13, 0
    %p74 = por %p72, %p73
    %p75 = scmp.ne.s32.totalorder %s61, %s62
    %p76 = scmp.eq.s32.totalorder %s14, 1
    %p77 = por %p75, %p76
    %p79 = scmp.ne.s32.totalorder %s62, %s78
    %p80 = scmp.eq.s32.totalorder %s14, 0
    %p81 = por %p79, %p80
    %s82 = ssub.s32 %s15, %s27
    %s83 = ssub.s32 %s16, %s23
    %s84 = sor.u32 %s82, %s83
    %p85 = scmp.eq.s32.totalorder %s84, 0
    %s87 = sadd.s32 %s86, 1
    %s88 = scalar_select %p85, %s86, %s87
    %p91 = pneg %p85
    %p92 = scmp.eq.s32.totalorder %s8, 1
    %p93 = por %p91, %p92
    %p94 = scmp.ne.s32.totalorder %s86, %s89
    %p95 = scmp.eq.s32.totalorder %s8, 0
    %p96 = por %p94, %p95
    %p97 = scmp.ne.s32.totalorder %s86, %s89
    %p98 = scmp.eq.s32.totalorder %s13, 1
    %p99 = por %p97, %p98
    %p100 = scmp.ne.s32.totalorder %s89, %s90
    %p101 = scmp.eq.s32.totalorder %s13, 0
    %p102 = por %p100, %p101
    %p103 = scmp.ne.s32.totalorder %s89, %s90
    %p104 = scmp.eq.s32.totalorder %s14, 1
    %p105 = por %p103, %p104
    %p107 = scmp.ne.s32.totalorder %s90, %s106
    %p108 = scmp.eq.s32.totalorder %s14, 0
    %p109 = por %p107, %p108
    %p110 = scmp.le.s32.totalorder 1, %s8
    %p111 = scmp.lt.s32.totalorder %s8, 3
    %p112 = pnand %p110, %p111
    %p113 = pneg %p112
    // Predicated region
    $region9: #{transformer_forward.20} parent=5 // pred_check
      _
    $region10: #{transformer_forward.20} parent=5 // pred_check_branch
      %115 = sbr.rel (%p112) target = $region12
    $region11: #{transformer_forward.20} parent=5 // pred_region
      %s116 = ssub.s32 %s8, 1
    $region12: #{transformer_forward.20} parent=5 // pred_fallthru
      _
    %p117 = scmp.lt.s32.totalorder %s8, 2
    // Predicated region
    $region13: #{transformer_forward.20} parent=5 // pred_check
      %p118 = pneg %p117
    $region14: #{transformer_forward.20} parent=5 // pred_check_branch
      %120 = sbr.rel (%p118) target = $region16
    $region15: #{transformer_forward.20} parent=5 // pred_region
      // Predicated region
      $region17: #{transformer_forward.20} parent=15 // pred_check
        %p121 = pneg %p40
      $region18: #{transformer_forward.20} parent=15 // pred_check_branch
        %123 = sbr.rel (%p121) target = $region20
      $region19: #{transformer_forward.20} parent=15 // pred_region
        %p124 = scmp.lt.s32.totalorder %s15, 1
        %s125 = scalar_select %p124, %s15, 1
        %s126 = smul.addr %s125, 4
        %s127 = scalar_lea.vmem %s0, %s126
      $region20: #{transformer_forward.20} parent=15 // pred_fallthru
        _
      // Predicated region
      $region21: #{transformer_forward.20} parent=15 // pred_check
        %p128 = pneg %p68
      $region22: #{transformer_forward.20} parent=15 // pred_check_branch
        %130 = sbr.rel (%p128) target = $region24
      $region23: #{transformer_forward.20} parent=15 // pred_region
        %p131 = scmp.lt.s32.totalorder %s15, 1
        %s132 = scalar_select %p131, %s15, 1
        %p133 = scmp.lt.s32.totalorder %s16, 0
        %s134 = scalar_select %p133, %s16, 0
        %s135 = sadd.s32 %s134, %s132
        %s136 = smul.addr %s135, 8
        %s137 = scalar_lea.vmem %s1, %s136
      $region24: #{transformer_forward.20} parent=15 // pred_fallthru
        _
    $region16: #{transformer_forward.20} parent=5 // pred_fallthru
      _
    %p138 = scmp.le.s32.totalorder 1, %s8
    %p139 = scmp.lt.s32.totalorder %s8, 3
    %p140 = pnand %p138, %p139
    %p141 = pneg %p140
    // Predicated region
    $region25: #{transformer_forward.20} parent=5 // pred_check
      _
    $region26: #{transformer_forward.20} parent=5 // pred_check_branch
      %143 = sbr.rel (%p140) target = $region28
    $region27: #{transformer_forward.20} parent=5 // pred_region
      %s144 = ssub.s32 %s8, 1
      %p145 = scmp.lt.s32.totalorder %s17, 1
      %s146 = scalar_select %p145, %s17, 1
      %s147 = smul.addr %s146, 4
      %s148 = scalar_lea.vmem %s0, %s147
      %p149 = pneg %p46
      %p150 = pneg %p43
      %p151 = scmp.lt.s32.totalorder %s17, 1
      %s152 = scalar_select %p151, %s17, 1
      %p153 = scmp.lt.s32.totalorder %s18, 0
      %s154 = scalar_select %p153, %s18, 0
      %s155 = sadd.s32 %s154, %s152
      %s156 = smul.addr %s155, 8
      %s157 = scalar_lea.vmem %s1, %s156
      %p158 = pneg %p74
      %p159 = pneg %p71
      %p160 = pneg %p102
      %p161 = pneg %p99
      %p162 = scmp.lt.s32.totalorder %s17, 1
      %s163 = scalar_select %p162, %s17, 1
      %p164 = scmp.lt.s32.totalorder %s18, 0
      %s165 = scalar_select %p164, %s18, 0
      %s166 = sadd.s32 %s165, %s163
      %s167 = smul.addr %s166, 4
      %s168 = scalar_lea.vmem %s2, %s167
      %p169 = scmp.lt.s32.totalorder %s17, 1
      %s170 = scalar_select %p169, %s17, 1
      %s171 = smul.addr %s170, 4
      %s172 = scalar_lea.vmem %s0, %s171
      %p173 = scmp.lt.s32.totalorder %s17, 1
      %s174 = scalar_select %p173, %s17, 1
      %p175 = scmp.lt.s32.totalorder %s18, 0
      %s176 = scalar_select %p175, %s18, 0
      %s177 = sadd.s32 %s176, %s174
      %s178 = smul.addr %s177, 8
      %s179 = scalar_lea.vmem %s1, %s178
      %p180 = scmp.lt.s32.totalorder %s17, 1
      %s181 = scalar_select %p180, %s17, 1
      %p182 = scmp.lt.s32.totalorder %s18, 0
      %s183 = scalar_select %p182, %s18, 0
      %s184 = sadd.s32 %s183, %s181
      %s185 = smul.addr %s184, 4
      %s186 = scalar_lea.vmem %s2, %s185
      %s188 = smul.u32 %s18, 8
      %s189 = sshra.s32 %s188, 3
      %s190 = sand.u32 %s188, 7
      %s191 = smul.addr %s189, 4
      %s192 = scalar_lea.vmem %s172, %s191
      %v193 = vld [vmem:[%s192] sm:$0xf]
      %v194 = vld [vmem:[%s172] sm:$0xf]
      %v195 = vld [vmem:[%s179] sm:$0xff]
      %v197 = vunpack.c.l.b16 %v194
      %v198 = vpack.c.b16 %v197, %v197
      %199 = vrot.lane.b32.xlu0 %v198, 96
      %v200 = vpop.permute.xlu0 %199
      %vm201 = vcmask 64512
      %v203 = vsel %vm201, %v193, 0
      %v206 = vsel %vm201, %v200, 0
      %208 = vmatprep.subr.bf16.mxu0 0
      %209 = vmatpush1.bf16.xpose.msra.mxu0 %v206
      %210 = vmatprep.subr.bf16.mxu0 0
      %211 = vmatpush1.bf16.xpose.msra.mxu0 0
      %212 = vmatprep.subr.bf16.mxu0 0
      %213 = vmatpush1.bf16.xpose.msra.mxu0 0
      %214 = vmatprep.subr.bf16.mxu0 0
      %215 = vmatpush1.bf16.xpose.msra.mxu0 0
      %216 = vmatprep.subr.bf16.mxu0 0
      %217 = vmatpush1.bf16.xpose.msra.mxu0 0
      %218 = vmatprep.subr.bf16.mxu0 0
      %219 = vmatpush1.bf16.xpose.msra.mxu0 0
      %220 = vmatprep.subr.bf16.mxu0 0
      %221 = vmatpush1.bf16.xpose.msra.mxu0 0
      %222 = vmatprep.subr.bf16.mxu0 0
      %223 = vmatpush1.bf16.xpose.msra.mxu0 0
      %224 = vmatprep.subr.bf16.mxu0 0
      %225 = vmatpush1.bf16.xpose.msra.mxu0 0
      %226 = vmatprep.subr.bf16.mxu0 0
      %227 = vmatpush1.bf16.xpose.msra.mxu0 0
      %228 = vmatprep.subr.bf16.mxu0 0
      %229 = vmatpush1.bf16.xpose.msra.mxu0 0
      %230 = vmatprep.subr.bf16.mxu0 0
      %231 = vmatpush1.bf16.xpose.msra.mxu0 0
      %232 = vmatprep.subr.bf16.mxu0 0
      %233 = vmatpush1.bf16.xpose.msra.mxu0 0
      %234 = vmatprep.subr.bf16.mxu0 0
      %235 = vmatpush1.bf16.xpose.msra.mxu0 0
      %236 = vmatprep.subr.bf16.mxu0 0
      %237 = vmatpush1.bf16.xpose.msra.mxu0 0
      %238 = vmatprep.subr.bf16.mxu0 0
      %239 = vmatpush1.bf16.xpose.msra.mxu0 0
      %240 = vmatprep.mubr.bf16.mxu0 0
      %241 = vmatmul.mubr.bf16.gmra.mrb[0].mxu0 %v203
      %v242 = vpop.f32.mrb[0].mxu0
      %v243 = vadd.f32 0.0, %v242
      %v244 = vpop.f32.mrb[0].mxu0
      %v245 = vpop.f32.mrb[0].mxu0
      %v246 = vpop.f32.mrb[0].mxu0
      %247 = vdwg.mxu0
      %v248 = vmul.f32 %v243, 0.35355338
      %vm249 = vcmp.eq.s32.totalorder %v195, 0
      %v250 = vsel %vm249, -1e+09, %v248
      %v251 = vsel %vm201, %v250, -inf
      %252 = vmax.xlane.f32.xlu0 %v251
      %v253 = vpop.xlane.xlu0 %252
      %v254 = vsub.f32 %v250, %v253
      %v255 = vmul.f32 %v254, 1.442695
      %v256 = vpow.pop %v255
      %v257 = vsel %vm201, %v256, 0.0
      %258 = vadd.xlane.f32.xlu0 %v257
      %v259 = vpop.xlane.xlu0 %258
      %v260 = vrcp.pop %v259
      %v261 = vmul.f32 %v256, %v260
      %v262 = vpack.c.bf16 %v261, %v261
      %263 = vrot.lane.b32.xlu0 %v198, 64
      %v264 = vpop.permute.xlu0 %263
      %v266 = vsel %vm201, %v262, 0
      %vm268 = vcmask 1043456
      %v270 = vsel %vm268, %v264, 0
      %272 = vmatprep.subr.bf16.mxu0 0
      %273 = vmatpush1.bf16.msra.mxu0 %v270
      %274 = vmatprep.subr.bf16.mxu0 0
      %275 = vmatpush1.bf16.msra.mxu0 0
      %276 = vmatprep.subr.bf16.mxu0 0
      %277 = vmatpush1.bf16.msra.mxu0 0
      %278 = vmatprep.subr.bf16.mxu0 0
      %279 = vmatpush1.bf16.msra.mxu0 0
      %280 = vmatprep.subr.bf16.mxu0 0
      %281 = vmatpush1.bf16.msra.mxu0 0
      %282 = vmatprep.subr.bf16.mxu0 0
      %283 = vmatpush1.bf16.msra.mxu0 0
      %284 = vmatprep.subr.bf16.mxu0 0
      %285 = vmatpush1.bf16.msra.mxu0 0
      %286 = vmatprep.subr.bf16.mxu0 0
      %287 = vmatpush1.bf16.msra.mxu0 0
      %288 = vmatprep.subr.bf16.mxu0 0
      %289 = vmatpush1.bf16.msra.mxu0 0
      %290 = vmatprep.subr.bf16.mxu0 0
      %291 = vmatpush1.bf16.msra.mxu0 0
      %292 = vmatprep.subr.bf16.mxu0 0
      %293 = vmatpush1.bf16.msra.mxu0 0
      %294 = vmatprep.subr.bf16.mxu0 0
      %295 = vmatpush1.bf16.msra.mxu0 0
      %296 = vmatprep.subr.bf16.mxu0 0
      %297 = vmatpush1.bf16.msra.mxu0 0
      %298 = vmatprep.subr.bf16.mxu0 0
      %299 = vmatpush1.bf16.msra.mxu0 0
      %300 = vmatprep.subr.bf16.mxu0 0
      %301 = vmatpush1.bf16.msra.mxu0 0
      %302 = vmatprep.subr.bf16.mxu0 0
      %303 = vmatpush1.bf16.msra.mxu0 0
      %304 = vmatprep.mubr.bf16.mxu0 0
      %305 = vmatmul.mubr.bf16.gmra.mrb[0].mxu0 %v266
      %v306 = vpop.f32.mrb[0].mxu0
      %v307 = vadd.f32 0.0, %v306
      %v308 = vpop.f32.mrb[0].mxu0
      %v309 = vpop.f32.mrb[0].mxu0
      %v310 = vpop.f32.mrb[0].mxu0
      %311 = vdwg.mxu0
      %v313 = vunpack.c.l.b16 %v193
      %v314 = vpack.c.b16 %v313, %v313
      %315 = vrot.lane.b32.xlu0 %v314, 120
      %v316 = vpop.permute.xlu0 %315
      %317 = vrot.lane.b32.xlu0 %v198, 88
      %v318 = vpop.permute.xlu0 %317
      %v320 = vsel %vm201, %v316, 0
      %v323 = vsel %vm201, %v318, 0
      %325 = vmatprep.subr.bf16.mxu0 0
      %326 = vmatpush1.bf16.xpose.msra.mxu0 %v323
      %327 = vmatprep.subr.bf16.mxu0 0
      %328 = vmatpush1.bf16.xpose.msra.mxu0 0
      %329 = vmatprep.subr.bf16.mxu0 0
      %330 = vmatpush1.bf16.xpose.msra.mxu0 0
      %331 = vmatprep.subr.bf16.mxu0 0
      %332 = vmatpush1.bf16.xpose.msra.mxu0 0
      %333 = vmatprep.subr.bf16.mxu0 0
      %334 = vmatpush1.bf16.xpose.msra.mxu0 0
      %335 = vmatprep.subr.bf16.mxu0 0
      %336 = vmatpush1.bf16.xpose.msra.mxu0 0
      %337 = vmatprep.subr.bf16.mxu0 0
      %338 = vmatpush1.bf16.xpose.msra.mxu0 0
      %339 = vmatprep.subr.bf16.mxu0 0
      %340 = vmatpush1.bf16.xpose.msra.mxu0 0
      %341 = vmatprep.subr.bf16.mxu0 0
      %342 = vmatpush1.bf16.xpose.msra.mxu0 0
      %343 = vmatprep.subr.bf16.mxu0 0
      %344 = vmatpush1.bf16.xpose.msra.mxu0 0
      %345 = vmatprep.subr.bf16.mxu0 0
      %346 = vmatpush1.bf16.xpose.msra.mxu0 0
      %347 = vmatprep.subr.bf16.mxu0 0
      %348 = vmatpush1.bf16.xpose.msra.mxu0 0
      %349 = vmatprep.subr.bf16.mxu0 0
      %350 = vmatpush1.bf16.xpose.msra.mxu0 0
      %351 = vmatprep.subr.bf16.mxu0 0
      %352 = vmatpush1.bf16.xpose.msra.mxu0 0
      %353 = vmatprep.subr.bf16.mxu0 0
      %354 = vmatpush1.bf16.xpose.msra.mxu0 0
      %355 = vmatprep.subr.bf16.mxu0 0
      %356 = vmatpush1.bf16.xpose.msra.mxu0 0
      %357 = vmatprep.mubr.bf16.mxu0 0
      %358 = vmatmul.mubr.bf16.gmra.mrb[0].mxu0 %v320
      %v359 = vpop.f32.mrb[0].mxu0
      %v360 = vadd.f32 0.0, %v359
      %v361 = vpop.f32.mrb[0].mxu0
      %v362 = vpop.f32.mrb[0].mxu0
      %v363 = vpop.f32.mrb[0].mxu0
      %364 = vdwg.mxu0
      %v365 = vmul.f32 %v360, 0.35355338
      %v366 = vsel %vm249, -1e+09, %v365
      %v367 = vsel %vm201, %v366, -inf
      %368 = vmax.xlane.f32.xlu0 %v367
      %v369 = vpop.xlane.xlu0 %368
      %v370 = vsub.f32 %v366, %v369
      %v371 = vmul.f32 %v370, 1.442695
      %v372 = vpow.pop %v371
      %v373 = vsel %vm201, %v372, 0.0
      %374 = vadd.xlane.f32.xlu0 %v373
      %v375 = vpop.xlane.xlu0 %374
      %v376 = vrcp.pop %v375
      %v377 = vmul.f32 %v372, %v376
      %v378 = vpack.c.bf16 %v377, %v377
      %379 = vrot.lane.b32.xlu0 %v198, 56
      %v380 = vpop.permute.xlu0 %379
      %v382 = vsel %vm201, %v378, 0
      %v385 = vsel %vm268, %v380, 0
      %387 = vmatprep.subr.bf16.mxu0 0
      %388 = vmatpush1.bf16.msra.mxu0 %v385
      %389 = vmatprep.subr.bf16.mxu0 0
      %390 = vmatpush1.bf16.msra.mxu0 0
      %391 = vmatprep.subr.bf16.mxu0 0
      %392 = vmatpush1.bf16.msra.mxu0 0
      %393 = vmatprep.subr.bf16.mxu0 0
      %394 = vmatpush1.bf16.msra.mxu0 0
      %395 = vmatprep.subr.bf16.mxu0 0
      %396 = vmatpush1.bf16.msra.mxu0 0
      %397 = vmatprep.subr.bf16.mxu0 0
      %398 = vmatpush1.bf16.msra.mxu0 0
      %399 = vmatprep.subr.bf16.mxu0 0
      %400 = vmatpush1.bf16.msra.mxu0 0
      %401 = vmatprep.subr.bf16.mxu0 0
      %402 = vmatpush1.bf16.msra.mxu0 0
      %403 = vmatprep.subr.bf16.mxu0 0
      %404 = vmatpush1.bf16.msra.mxu0 0
      %405 = vmatprep.subr.bf16.mxu0 0
      %406 = vmatpush1.bf16.msra.mxu0 0
      %407 = vmatprep.subr.bf16.mxu0 0
      %408 = vmatpush1.bf16.msra.mxu0 0
      %409 = vmatprep.subr.bf16.mxu0 0
      %410 = vmatpush1.bf16.msra.mxu0 0
      %411 = vmatprep.subr.bf16.mxu0 0
      %412 = vmatpush1.bf16.msra.mxu0 0
      %413 = vmatprep.subr.bf16.mxu0 0
      %414 = vmatpush1.bf16.msra.mxu0 0
      %415 = vmatprep.subr.bf16.mxu0 0
      %416 = vmatpush1.bf16.msra.mxu0 0
      %417 = vmatprep.subr.bf16.mxu0 0
      %418 = vmatpush1.bf16.msra.mxu0 0
      %419 = vmatprep.mubr.bf16.mxu0 0
      %420 = vmatmul.mubr.bf16.gmra.mrb[0].mxu0 %v382
      %v421 = vpop.f32.mrb[0].mxu0
      %v422 = vadd.f32 0.0, %v421
      %v423 = vpop.f32.mrb[0].mxu0
      %v424 = vpop.f32.mrb[0].mxu0
      %v425 = vpop.f32.mrb[0].mxu0
      %426 = vdwg.mxu0
      %427 = vrot.lane.b32.xlu0 %v314, 112
      %v428 = vpop.permute.xlu0 %427
      %429 = vrot.lane.b32.xlu0 %v198, 80
      %v430 = vpop.permute.xlu0 %429
      %v432 = vsel %vm201, %v428, 0
      %v435 = vsel %vm201, %v430, 0
      %437 = vmatprep.subr.bf16.mxu0 0
      %438 = vmatpush1.bf16.xpose.msra.mxu0 %v435
      %439 = vmatprep.subr.bf16.mxu0 0
      %440 = vmatpush1.bf16.xpose.msra.mxu0 0
      %441 = vmatprep.subr.bf16.mxu0 0
      %442 = vmatpush1.bf16.xpose.msra.mxu0 0
      %443 = vmatprep.subr.bf16.mxu0 0
      %444 = vmatpush1.bf16.xpose.msra.mxu0 0
      %445 = vmatprep.subr.bf16.mxu0 0
      %446 = vmatpush1.bf16.xpose.msra.mxu0 0
      %447 = vmatprep.subr.bf16.mxu0 0
      %448 = vmatpush1.bf16.xpose.msra.mxu0 0
      %449 = vmatprep.subr.bf16.mxu0 0
      %450 = vmatpush1.bf16.xpose.msra.mxu0 0
      %451 = vmatprep.subr.bf16.mxu0 0
      %452 = vmatpush1.bf16.xpose.msra.mxu0 0
      %453 = vmatprep.subr.bf16.mxu0 0
      %454 = vmatpush1.bf16.xpose.msra.mxu0 0
      %455 = vmatprep.subr.bf16.mxu0 0
      %456 = vmatpush1.bf16.xpose.msra.mxu0 0
      %457 = vmatprep.subr.bf16.mxu0 0
      %458 = vmatpush1.bf16.xpose.msra.mxu0 0
      %459 = vmatprep.subr.bf16.mxu0 0
      %460 = vmatpush1.bf16.xpose.msra.mxu0 0
      %461 = vmatprep.subr.bf16.mxu0 0
      %462 = vmatpush1.bf16.xpose.msra.mxu0 0
      %463 = vmatprep.subr.bf16.mxu0 0
      %464 = vmatpush1.bf16.xpose.msra.mxu0 0
      %465 = vmatprep.subr.bf16.mxu0 0
      %466 = vmatpush1.bf16.xpose.msra.mxu0 0
      %467 = vmatprep.subr.bf16.mxu0 0
      %468 = vmatpush1.bf16.xpose.msra.mxu0 0
      %469 = vmatprep.mubr.bf16.mxu0 0
      %470 = vmatmul.mubr.bf16.gmra.mrb[0].mxu0 %v432
      %v471 = vpop.f32.mrb[0].mxu0
      %v472 = vadd.f32 0.0, %v471
      %v473 = vpop.f32.mrb[0].mxu0
      %v474 = vpop.f32.mrb[0].mxu0
      %v475 = vpop.f32.mrb[0].mxu0
      %476 = vdwg.mxu0
      %v477 = vmul.f32 %v472, 0.35355338
      %v478 = vsel %vm249, -1e+09, %v477
      %v479 = vsel %vm201, %v478, -inf
      %480 = vmax.xlane.f32.xlu0 %v479
      %v481 = vpop.xlane.xlu0 %480
      %v482 = vsub.f32 %v478, %v481
      %v483 = vmul.f32 %v482, 1.442695
      %v484 = vpow.pop %v483
      %v485 = vsel %vm201, %v484, 0.0
      %486 = vadd.xlane.f32.xlu0 %v485
      %v487 = vpop.xlane.xlu0 %486
      %v488 = vrcp.pop %v487
      %v489 = vmul.f32 %v484, %v488
      %v490 = vpack.c.bf16 %v489, %v489
      %491 = vrot.lane.b32.xlu0 %v198, 48
      %v492 = vpop.permute.xlu0 %491
      %v494 = vsel %vm201, %v490, 0
      %v497 = vsel %vm268, %v492, 0
      %499 = vmatprep.subr.bf16.mxu0 0
      %500 = vmatpush1.bf16.msra.mxu0 %v497
      %501 = vmatprep.subr.bf16.mxu0 0
      %502 = vmatpush1.bf16.msra.mxu0 0
      %503 = vmatprep.subr.bf16.mxu0 0
      %504 = vmatpush1.bf16.msra.mxu0 0
      %505 = vmatprep.subr.bf16.mxu0 0
      %506 = vmatpush1.bf16.msra.mxu0 0
      %507 = vmatprep.subr.bf16.mxu0 0
      %508 = vmatpush1.bf16.msra.mxu0 0
      %509 = vmatprep.subr.bf16.mxu0 0
      %510 = vmatpush1.bf16.msra.mxu0 0
      %511 = vmatprep.subr.bf16.mxu0 0
      %512 = vmatpush1.bf16.msra.mxu0 0
      %513 = vmatprep.subr.bf16.mxu0 0
      %514 = vmatpush1.bf16.msra.mxu0 0
      %515 = vmatprep.subr.bf16.mxu0 0
      %516 = vmatpush1.bf16.msra.mxu0 0
      %517 = vmatprep.subr.bf16.mxu0 0
      %518 = vmatpush1.bf16.msra.mxu0 0
      %519 = vmatprep.subr.bf16.mxu0 0
      %520 = vmatpush1.bf16.msra.mxu0 0
      %521 = vmatprep.subr.bf16.mxu0 0
      %522 = vmatpush1.bf16.msra.mxu0 0
      %523 = vmatprep.subr.bf16.mxu0 0
      %524 = vmatpush1.bf16.msra.mxu0 0
      %525 = vmatprep.subr.bf16.mxu0 0
      %526 = vmatpush1.bf16.msra.mxu0 0
      %527 = vmatprep.subr.bf16.mxu0 0
      %528 = vmatpush1.bf16.msra.mxu0 0
      %529 = vmatprep.subr.bf16.mxu0 0
      %530 = vmatpush1.bf16.msra.mxu0 0
      %531 = vmatprep.mubr.bf16.mxu0 0
      %532 = vmatmul.mubr.bf16.gmra.mrb[0].mxu0 %v494
      %v533 = vpop.f32.mrb[0].mxu0
      %v534 = vadd.f32 0.0, %v533
      %v535 = vpop.f32.mrb[0].mxu0
      %v536 = vpop.f32.mrb[0].mxu0
      %v537 = vpop.f32.mrb[0].mxu0
      %538 = vdwg.mxu0
      %539 = vrot.lane.b32.xlu0 %v314, 104
      %v540 = vpop.permute.xlu0 %539
      %541 = vrot.lane.b32.xlu0 %v198, 72
      %v542 = vpop.permute.xlu0 %541
      %v544 = vsel %vm201, %v540, 0
      %v547 = vsel %vm201, %v542, 0
      %549 = vmatprep.subr.bf16.mxu0 0
      %550 = vmatpush1.bf16.xpose.msra.mxu0 %v547
      %551 = vmatprep.subr.bf16.mxu0 0
      %552 = vmatpush1.bf16.xpose.msra.mxu0 0
      %553 = vmatprep.subr.bf16.mxu0 0
      %554 = vmatpush1.bf16.xpose.msra.mxu0 0
      %555 = vmatprep.subr.bf16.mxu0 0
      %556 = vmatpush1.bf16.xpose.msra.mxu0 0
      %557 = vmatprep.subr.bf16.mxu0 0
      %558 = vmatpush1.bf16.xpose.msra.mxu0 0
      %559 = vmatprep.subr.bf16.mxu0 0
      %560 = vmatpush1.bf16.xpose.msra.mxu0 0
      %561 = vmatprep.subr.bf16.mxu0 0
      %562 = vmatpush1.bf16.xpose.msra.mxu0 0
      %563 = vmatprep.subr.bf16.mxu0 0
      %564 = vmatpush1.bf16.xpose.msra.mxu0 0
      %565 = vmatprep.subr.bf16.mxu0 0
      %566 = vmatpush1.bf16.xpose.msra.mxu0 0
      %567 = vmatprep.subr.bf16.mxu0 0
      %568 = vmatpush1.bf16.xpose.msra.mxu0 0
      %569 = vmatprep.subr.bf16.mxu0 0
      %570 = vmatpush1.bf16.xpose.msra.mxu0 0
      %571 = vmatprep.subr.bf16.mxu0 0
      %572 = vmatpush1.bf16.xpose.msra.mxu0 0
      %573 = vmatprep.subr.bf16.mxu0 0
      %574 = vmatpush1.bf16.xpose.msra.mxu0 0
      %575 = vmatprep.subr.bf16.mxu0 0
      %576 = vmatpush1.bf16.xpose.msra.mxu0 0
      %577 = vmatprep.subr.bf16.mxu0 0
      %578 = vmatpush1.bf16.xpose.msra.mxu0 0
      %579 = vmatprep.subr.bf16.mxu0 0
      %580 = vmatpush1.bf16.xpose.msra.mxu0 0
      %581 = vmatprep.mubr.bf16.mxu0 0
      %582 = vmatmul.mubr.bf16.gmra.mrb[0].mxu0 %v544
      %v583 = vpop.f32.mrb[0].mxu0
      %v584 = vadd.f32 0.0, %v583
      %v585 = vpop.f32.mrb[0].mxu0
      %v586 = vpop.f32.mrb[0].mxu0
      %v587 = vpop.f32.mrb[0].mxu0
      %588 = vdwg.mxu0
      %v589 = vmul.f32 %v584, 0.35355338
      %v590 = vsel %vm249, -1e+09, %v589
      %v591 = vsel %vm201, %v590, -inf
      %592 = vmax.xlane.f32.xlu0 %v591
      %v593 = vpop.xlane.xlu0 %592
      %v594 = vsub.f32 %v590, %v593
      %v595 = vmul.f32 %v594, 1.442695
      %v596 = vpow.pop %v595
      %v597 = vsel %vm201, %v596, 0.0
      %598 = vadd.xlane.f32.xlu0 %v597
      %v599 = vpop.xlane.xlu0 %598
      %v600 = vrcp.pop %v599
      %v601 = vmul.f32 %v596, %v600
      %v602 = vpack.c.bf16 %v601, %v601
      %603 = vrot.lane.b32.xlu0 %v198, 40
      %v604 = vpop.permute.xlu0 %603
      %v606 = vsel %vm201, %v602, 0
      %v609 = vsel %vm268, %v604, 0
      %611 = vmatprep.subr.bf16.mxu0 0
      %612 = vmatpush1.bf16.msra.mxu0 %v609
      %613 = vmatprep.subr.bf16.mxu0 0
      %614 = vmatpush1.bf16.msra.mxu0 0
      %615 = vmatprep.subr.bf16.mxu0 0
      %616 = vmatpush1.bf16.msra.mxu0 0
      %617 = vmatprep.subr.bf16.mxu0 0
      %618 = vmatpush1.bf16.msra.mxu0 0
      %619 = vmatprep.subr.bf16.mxu0 0
      %620 = vmatpush1.bf16.msra.mxu0 0
      %621 = vmatprep.subr.bf16.mxu0 0
      %622 = vmatpush1.bf16.msra.mxu0 0
      %623 = vmatprep.subr.bf16.mxu0 0
      %624 = vmatpush1.bf16.msra.mxu0 0
      %625 = vmatprep.subr.bf16.mxu0 0
      %626 = vmatpush1.bf16.msra.mxu0 0
      %627 = vmatprep.subr.bf16.mxu0 0
      %628 = vmatpush1.bf16.msra.mxu0 0
      %629 = vmatprep.subr.bf16.mxu0 0
      %630 = vmatpush1.bf16.msra.mxu0 0
      %631 = vmatprep.subr.bf16.mxu0 0
      %632 = vmatpush1.bf16.msra.mxu0 0
      %633 = vmatprep.subr.bf16.mxu0 0
      %634 = vmatpush1.bf16.msra.mxu0 0
      %635 = vmatprep.subr.bf16.mxu0 0
      %636 = vmatpush1.bf16.msra.mxu0 0
      %637 = vmatprep.subr.bf16.mxu0 0
      %638 = vmatpush1.bf16.msra.mxu0 0
      %639 = vmatprep.subr.bf16.mxu0 0
      %640 = vmatpush1.bf16.msra.mxu0 0
      %641 = vmatprep.subr.bf16.mxu0 0
      %642 = vmatpush1.bf16.msra.mxu0 0
      %643 = vmatprep.mubr.bf16.mxu0 0
      %644 = vmatmul.mubr.bf16.gmra.mrb[0].mxu0 %v606
      %v645 = vpop.f32.mrb[0].mxu0
      %v646 = vadd.f32 0.0, %v645
      %v647 = vpop.f32.mrb[0].mxu0
      %v648 = vpop.f32.mrb[0].mxu0
      %v649 = vpop.f32.mrb[0].mxu0
      %650 = vdwg.mxu0
      %652 = vrot.lane.b32.xlu0 %v422, 8
      %v653 = vpop.permute.xlu0 %652
      %656 = vrot.lane.b32.xlu0 %v534, 16
      %v657 = vpop.permute.xlu0 %656
      %660 = vrot.lane.b32.xlu0 %v646, 24
      %v661 = vpop.permute.xlu0 %660
      %v663 = vsel %vm201, %v307, %v653
      %vm664 = vcmask 130048
      %v665 = vsel %vm664, %v663, %v657
      %vm666 = vcmask 195584
      %v667 = vsel %vm666, %v665, %v661
      %v668 = vpack.c.bf16 %v667, %v667
      %vm669 = vcmask 257024
      %670 = vst.msk [vmem:[%s186] sm:$0xf] %vm669, %v668
      %p671 = scmp.lt.s32.totalorder %s17, 1
      %s672 = scalar_select %p671, %s17, 1
      %p673 = scmp.lt.s32.totalorder %s18, 0
      %s674 = scalar_select %p673, %s18, 0
      %s675 = sadd.s32 %s674, %s672
      %s676 = smul.addr %s675, 4
      %s677 = scalar_lea.vmem %s2, %s676
      // Predicated region
      $region29: #{transformer_forward.20} parent=27 // pred_check
        %p678 = pneg %p99
      $region30: #{transformer_forward.20} parent=27 // pred_check_branch
        %680 = sbr.rel (%p678) target = $region32
      $region31: #{transformer_forward.20} parent=27 // pred_region
        _
      $region32: #{transformer_forward.20} parent=27 // pred_fallthru
        _
    $region28: #{transformer_forward.20} parent=5 // pred_fallthru
      _
    %p681 = scmp.le.s32.totalorder 2, %s8
    // Predicated region
    $region33: #{transformer_forward.20} parent=5 // pred_check
      %p682 = pneg %p681
    $region34: #{transformer_forward.20} parent=5 // pred_check_branch
      %684 = sbr.rel (%p682) target = $region36
    $region35: #{transformer_forward.20} parent=5 // pred_region
      %s685 = ssub.s32 %s8, 2
      // Predicated region
      $region37: #{transformer_forward.20} parent=35 // pred_check
        %p686 = pneg %p105
      $region38: #{transformer_forward.20} parent=35 // pred_check_branch
        %688 = sbr.rel (%p686) target = $region40
      $region39: #{transformer_forward.20} parent=35 // pred_region
        %p689 = scmp.lt.s32.totalorder %s19, 1
        %s690 = scalar_select %p689, %s19, 1
        %p691 = scmp.lt.s32.totalorder %s20, 0
        %s692 = scalar_select %p691, %s20, 0
        %s693 = sadd.s32 %s692, %s690
        %s694 = smul.addr %s693, 4
        %s695 = scalar_lea.vmem %s2, %s694
      $region40: #{transformer_forward.20} parent=35 // pred_fallthru
        _
    $region36: #{transformer_forward.20} parent=5 // pred_fallthru
      _
  $region6: #{transformer_forward.20} parent=0 // loop_footer
    %s12 = sadd.s32 1, %s8
  $region7: #{transformer_forward.20} parent=0 // loop_footer_branch
    %7 = sbr.rel target = $region3
  $region8: #{transformer_forward.20} parent=0 // loop_exit
    _

// kernel: transformer_forward.21
$region0: #{transformer_forward.21}
  #allocation0 [shape = 'u32[]', space=smem, size = 0x4, offset = 0x4, fixed_abs, tag = 'smem constant byte address 0x4 - core index']
  #allocation1 [shape = 'u32[144,128]{1,0:T(1,128)}', space=vmem, size = 0x12000, scoped, tag = 'internal scratch']
  #allocation2 [shape = 'f32[16,32]{1,0:T(8,128)}', space=vmem, size = 0x2000, scoped, tag = 'scratch operand']
  %s0 = inlined_call_operand.vmem [shape: bf16[16,32], index: 0, kind: input, shape index: {}]
  %s1 = inlined_call_operand.vmem [shape: bf16[32,32], index: 1, kind: input, shape index: {}]
  %s2 = inlined_call_operand.vmem [shape: f32[1,32], index: 2, kind: input, shape index: {}]
  %s3 = inlined_call_operand.vmem [shape: f32[16,32], index: 3, kind: input, shape index: {}]
  %s4 = inlined_call_operand.vmem [shape: f32[16,32], index: 4, kind: output, shape index: {}]
  %s5 = sld [smem:[#allocation0]]
  $region34: #{transformer_forward.21} parent=0
    _
  %s7 = ssub.s32 1, %s5
  %s8 = scalar_select 0, %s7, %s5
  // Predicated region
  $region2: #{transformer_forward.21} parent=0 // pred_check
    _
  $region3: #{transformer_forward.21} parent=0 // pred_check_branch
    %10 = sbr.rel (0) target = $region5
  $region4: #{transformer_forward.21} parent=0 // pred_region
    _
  $region5: #{transformer_forward.21} parent=0 // pred_fallthru
    _
  // Predicated region
  $region6: #{transformer_forward.21} parent=0 // pred_check
    _
  $region7: #{transformer_forward.21} parent=0 // pred_check_branch
    %12 = sbr.rel (0) target = $region9
  $region8: #{transformer_forward.21} parent=0 // pred_region
    _
  $region9: #{transformer_forward.21} parent=0 // pred_fallthru
    _
  // Predicated region
  $region10: #{transformer_forward.21} parent=0 // pred_check
    _
  $region11: #{transformer_forward.21} parent=0 // pred_check_branch
    %14 = sbr.rel (0) target = $region13
  $region12: #{transformer_forward.21} parent=0 // pred_region
    _
  $region13: #{transformer_forward.21} parent=0 // pred_fallthru
    _
  // Predicated region
  $region14: #{transformer_forward.21} parent=0 // pred_check
    _
  $region15: #{transformer_forward.21} parent=0 // pred_check_branch
    %16 = sbr.rel (0) target = $region17
  $region16: #{transformer_forward.21} parent=0 // pred_region
    _
  $region17: #{transformer_forward.21} parent=0 // pred_fallthru
    _
  %p18 = scmp.eq.s32.totalorder 0, 0
  // Predicated region
  $region18: #{transformer_forward.21} parent=0 // pred_check
    %p19 = pneg %p18
  $region19: #{transformer_forward.21} parent=0 // pred_check_branch
    %21 = sbr.rel (%p19) target = $region21
  $region20: #{transformer_forward.21} parent=0 // pred_region
    %vm22 = vcmask 261120
    %23 = vst.msk [vmem:[#allocation2] sm:$0xff] %vm22, 0.0
    %24 = vst.msk [vmem:[#allocation2 + $0x8] sm:$0xff] %vm22, 0.0
  $region21: #{transformer_forward.21} parent=0 // pred_fallthru
    _
  %v25 = vld [vmem:[#allocation2] sm:$0xff]
  %v26 = vld [vmem:[#allocation2 + $0x8] sm:$0xff]
  %v27 = vld [vmem:[%s0] sm:$0xf]
  %v28 = vld [vmem:[%s0 + $0x4] sm:$0xf]
  %v29 = vld [vmem:[%s1] sm:$0xf]
  %v30 = vld [vmem:[%s1 + $0x4] sm:$0xf]
  %v31 = vld [vmem:[%s1 + $0x8] sm:$0xf]
  %v32 = vld [vmem:[%s1 + $0xc] sm:$0xf]
  %v35 = vunpack.c.l.b16 %v27
  %v36 = vunpack.c.l.b16 %v28
  %v37 = vpack.c.b16 %v36, %v35
  %v42 = vunpack.c.l.b16 %v29
  %v43 = vunpack.c.l.b16 %v30
  %v44 = vunpack.c.l.b16 %v31
  %v45 = vunpack.c.l.b16 %v32
  %v46 = vpack.c.b16 %v43, %v42
  %v47 = vpack.c.b16 %v45, %v44
  %vm50 = vcmask 261120
  %v52 = vsel %vm50, %v37, 0
  %54 = vmatprep.subr.bf16.mxu0 0
  %55 = vmatpush1.bf16.msra.mxu0 %v46
  %56 = vmatprep.subr.bf16.mxu0 0
  %57 = vmatpush1.bf16.msra.mxu0 %v47
  %58 = vmatprep.subr.bf16.mxu0 0
  %59 = vmatpush1.bf16.msra.mxu0 0
  %60 = vmatprep.subr.bf16.mxu0 0
  %61 = vmatpush1.bf16.msra.mxu0 0
  %62 = vmatprep.subr.bf16.mxu0 0
  %63 = vmatpush1.bf16.msra.mxu0 0
  %64 = vmatprep.subr.bf16.mxu0 0
  %65 = vmatpush1.bf16.msra.mxu0 0
  %66 = vmatprep.subr.bf16.mxu0 0
  %67 = vmatpush1.bf16.msra.mxu0 0
  %68 = vmatprep.subr.bf16.mxu0 0
  %69 = vmatpush1.bf16.msra.mxu0 0
  %70 = vmatprep.subr.bf16.mxu0 0
  %71 = vmatpush1.bf16.msra.mxu0 0
  %72 = vmatprep.subr.bf16.mxu0 0
  %73 = vmatpush1.bf16.msra.mxu0 0
  %74 = vmatprep.subr.bf16.mxu0 0
  %75 = vmatpush1.bf16.msra.mxu0 0
  %76 = vmatprep.subr.bf16.mxu0 0
  %77 = vmatpush1.bf16.msra.mxu0 0
  %78 = vmatprep.subr.bf16.mxu0 0
  %79 = vmatpush1.bf16.msra.mxu0 0
  %80 = vmatprep.subr.bf16.mxu0 0
  %81 = vmatpush1.bf16.msra.mxu0 0
  %82 = vmatprep.subr.bf16.mxu0 0
  %83 = vmatpush1.bf16.msra.mxu0 0
  %84 = vmatprep.subr.bf16.mxu0 0
  %85 = vmatpush1.bf16.msra.mxu0 0
  %86 = vmatprep.mubr.bf16.mxu0 0
  %87 = vmatmul.mubr.bf16.gmra.mrb[0].mxu0 %v52
  %v88 = vpop.f32.mrb[0].mxu0
  %v89 = vadd.f32 0.0, %v88
  %v90 = vpop.f32.mrb[0].mxu0
  %v91 = vpop.f32.mrb[0].mxu0
  %v92 = vadd.f32 0.0, %v91
  %v93 = vpop.f32.mrb[0].mxu0
  %94 = vdwg.mxu0
  %v95 = vadd.f32 %v25, %v89
  %v96 = vadd.f32 %v26, %v92
  %97 = vst.msk [vmem:[#allocation2] sm:$0xff] %vm50, %v95
  %98 = vst.msk [vmem:[#allocation2 + $0x8] sm:$0xff] %vm50, %v96
  // Predicated region
  $region22: #{transformer_forward.21} parent=0 // pred_check
    %p99 = pneg %p18
  $region23: #{transformer_forward.21} parent=0 // pred_check_branch
    %101 = sbr.rel (%p99) target = $region25
  $region24: #{transformer_forward.21} parent=0 // pred_region
    %v102 = vld [vmem:[#allocation2] sm:$0xff]
    %v103 = vld [vmem:[#allocation2 + $0x8] sm:$0xff]
    %v104 = vld [vmem:[%s2] sm:$0x1]
    %v106 = vlaneseq
    %v107 = vshrl.u32 %v106, 7
    %v108 = vsub.s32 0, %v107
    %v109 = vrot.slane %v104, %v108
    %v111 = vadd.f32 %v102, %v109
    %v112 = vadd.f32 %v103, %v109
    %v113 = vld [vmem:[%s3] sm:$0xff]
    %v114 = vld [vmem:[%s3 + $0x8] sm:$0xff]
    %v115 = vadd.f32 %v111, %v113
    %v116 = vadd.f32 %v112, %v114
    %117 = vst.msk [vmem:[%s4] sm:$0xff] %vm50, %v115
    %118 = vst.msk [vmem:[%s4 + $0x8] sm:$0xff] %vm50, %v116
  $region25: #{transformer_forward.21} parent=0 // pred_fallthru
    _
  // Predicated region
  $region26: #{transformer_forward.21} parent=0 // pred_check
    _
  $region27: #{transformer_forward.21} parent=0 // pred_check_branch
    %120 = sbr.rel (0) target = $region29
  $region28: #{transformer_forward.21} parent=0 // pred_region
    _
  $region29: #{transformer_forward.21} parent=0 // pred_fallthru
    _
  // Predicated region
  $region30: #{transformer_forward.21} parent=0 // pred_check
    _
  $region31: #{transformer_forward.21} parent=0 // pred_check_branch
    %122 = sbr.rel (0) target = $region33
  $region32: #{transformer_forward.21} parent=0 // pred_region
    _
  $region33: #{transformer_forward.21} parent=0 // pred_fallthru
    _

// kernel: transformer_forward.23
$region0: #{transformer_forward.23}
  #allocation0 [shape = 'u32[]', space=smem, size = 0x4, offset = 0x4, fixed_abs, tag = 'smem constant byte address 0x4 - core index']
  #allocation1 [shape = 'u32[144,128]{1,0:T(1,128)}', space=vmem, size = 0x12000, scoped, tag = 'internal scratch']
  #allocation2 [shape = 'f32[16,128]{1,0:T(8,128)}', space=vmem, size = 0x2000, scoped, tag = 'scratch operand']
  %s0 = inlined_call_operand.vmem [shape: bf16[16,32], index: 0, kind: input, shape index: {}]
  %s1 = inlined_call_operand.vmem [shape: bf16[32,128], index: 1, kind: input, shape index: {}]
  %s2 = inlined_call_operand.vmem [shape: f32[1,128], index: 2, kind: input, shape index: {}]
  %s3 = inlined_call_operand.vmem [shape: bf16[16,128], index: 3, kind: output, shape index: {}]
  %s4 = sld [smem:[#allocation0]]
  $region30: #{transformer_forward.23} parent=0
    _
  %s6 = ssub.s32 1, %s4
  %s7 = scalar_select 0, %s6, %s4
  // Predicated region
  $region2: #{transformer_forward.23} parent=0 // pred_check
    _
  $region3: #{transformer_forward.23} parent=0 // pred_check_branch
    %9 = sbr.rel (0) target = $region5
  $region4: #{transformer_forward.23} parent=0 // pred_region
    _
  $region5: #{transformer_forward.23} parent=0 // pred_fallthru
    _
  // Predicated region
  $region6: #{transformer_forward.23} parent=0 // pred_check
    _
  $region7: #{transformer_forward.23} parent=0 // pred_check_branch
    %11 = sbr.rel (0) target = $region9
  $region8: #{transformer_forward.23} parent=0 // pred_region
    _
  $region9: #{transformer_forward.23} parent=0 // pred_fallthru
    _
  // Predicated region
  $region10: #{transformer_forward.23} parent=0 // pred_check
    _
  $region11: #{transformer_forward.23} parent=0 // pred_check_branch
    %13 = sbr.rel (0) target = $region13
  $region12: #{transformer_forward.23} parent=0 // pred_region
    _
  $region13: #{transformer_forward.23} parent=0 // pred_fallthru
    _
  %p15 = scmp.eq.s32.totalorder 0, 0
  // Predicated region
  $region14: #{transformer_forward.23} parent=0 // pred_check
    %p16 = pneg %p15
  $region15: #{transformer_forward.23} parent=0 // pred_check_branch
    %18 = sbr.rel (%p16) target = $region17
  $region16: #{transformer_forward.23} parent=0 // pred_region
    %19 = vst [vmem:[#allocation2] sm:$0xff] 0.0
    %20 = vst [vmem:[#allocation2 + $0x8] sm:$0xff] 0.0
  $region17: #{transformer_forward.23} parent=0 // pred_fallthru
    _
  %v21 = vld [vmem:[#allocation2] sm:$0xff]
  %v22 = vld [vmem:[#allocation2 + $0x8] sm:$0xff]
  %v23 = vld [vmem:[%s0] sm:$0xf]
  %v24 = vld [vmem:[%s0 + $0x4] sm:$0xf]
  %v25 = vld [vmem:[%s1] sm:$0xf]
  %v26 = vld [vmem:[%s1 + $0x4] sm:$0xf]
  %v27 = vld [vmem:[%s1 + $0x8] sm:$0xf]
  %v28 = vld [vmem:[%s1 + $0xc] sm:$0xf]
  %v31 = vunpack.c.l.b16 %v23
  %v32 = vunpack.c.l.b16 %v24
  %v33 = vpack.c.b16 %v32, %v31
  %v38 = vunpack.c.l.b16 %v25
  %v39 = vunpack.c.l.b16 %v26
  %v40 = vunpack.c.l.b16 %v27
  %v41 = vunpack.c.l.b16 %v28
  %v42 = vpack.c.b16 %v39, %v38
  %v43 = vpack.c.b16 %v41, %v40
  %vm46 = vcmask 261120
  %v48 = vsel %vm46, %v33, 0
  %50 = vmatprep.subr.bf16.mxu0 0
  %51 = vmatpush1.bf16.msra.mxu0 %v42
  %52 = vmatprep.subr.bf16.mxu0 0
  %53 = vmatpush1.bf16.msra.mxu0 %v43
  %54 = vmatprep.subr.bf16.mxu0 0
  %55 = vmatpush1.bf16.msra.mxu0 0
  %56 = vmatprep.subr.bf16.mxu0 0
  %57 = vmatpush1.bf16.msra.mxu0 0
  %58 = vmatprep.subr.bf16.mxu0 0
  %59 = vmatpush1.bf16.msra.mxu0 0
  %60 = vmatprep.subr.bf16.mxu0 0
  %61 = vmatpush1.bf16.msra.mxu0 0
  %62 = vmatprep.subr.bf16.mxu0 0
  %63 = vmatpush1.bf16.msra.mxu0 0
  %64 = vmatprep.subr.bf16.mxu0 0
  %65 = vmatpush1.bf16.msra.mxu0 0
  %66 = vmatprep.subr.bf16.mxu0 0
  %67 = vmatpush1.bf16.msra.mxu0 0
  %68 = vmatprep.subr.bf16.mxu0 0
  %69 = vmatpush1.bf16.msra.mxu0 0
  %70 = vmatprep.subr.bf16.mxu0 0
  %71 = vmatpush1.bf16.msra.mxu0 0
  %72 = vmatprep.subr.bf16.mxu0 0
  %73 = vmatpush1.bf16.msra.mxu0 0
  %74 = vmatprep.subr.bf16.mxu0 0
  %75 = vmatpush1.bf16.msra.mxu0 0
  %76 = vmatprep.subr.bf16.mxu0 0
  %77 = vmatpush1.bf16.msra.mxu0 0
  %78 = vmatprep.subr.bf16.mxu0 0
  %79 = vmatpush1.bf16.msra.mxu0 0
  %80 = vmatprep.subr.bf16.mxu0 0
  %81 = vmatpush1.bf16.msra.mxu0 0
  %82 = vmatprep.mubr.bf16.mxu0 0
  %83 = vmatmul.mubr.bf16.gmra.mrb[0].mxu0 %v48
  %v84 = vpop.f32.mrb[0].mxu0
  %v85 = vadd.f32 0.0, %v84
  %v86 = vpop.f32.mrb[0].mxu0
  %v87 = vpop.f32.mrb[0].mxu0
  %v88 = vadd.f32 0.0, %v87
  %v89 = vpop.f32.mrb[0].mxu0
  %90 = vdwg.mxu0
  %v91 = vadd.f32 %v21, %v85
  %v92 = vadd.f32 %v22, %v88
  %93 = vst [vmem:[#allocation2] sm:$0xff] %v91
  %94 = vst [vmem:[#allocation2 + $0x8] sm:$0xff] %v92
  // Predicated region
  $region18: #{transformer_forward.23} parent=0 // pred_check
    %p95 = pneg %p15
  $region19: #{transformer_forward.23} parent=0 // pred_check_branch
    %97 = sbr.rel (%p95) target = $region21
  $region20: #{transformer_forward.23} parent=0 // pred_region
    %v98 = vld [vmem:[#allocation2] sm:$0xff]
    %v99 = vld [vmem:[#allocation2 + $0x8] sm:$0xff]
    %v100 = vld [vmem:[%s2] sm:$0x1]
    %v102 = vlaneseq
    %v103 = vshrl.u32 %v102, 7
    %v104 = vsub.s32 0, %v103
    %v105 = vrot.slane %v100, %v104
    %v107 = vadd.f32 %v98, %v105
    %v108 = vadd.f32 %v99, %v105
    %v109 = vmax.f32 %v107, 0.0
    %v110 = vmax.f32 %v108, 0.0
    %v111 = vpack.c.bf16 %v110, %v109
    %v113 = vunpack.c.l.b16 %v111
    %v114 = vunpack.c.h.b16 %v111
    %v115 = vpack.c.b16 %v113, %v113
    %v116 = vpack.c.b16 %v114, %v114
    %119 = vst [vmem:[%s3] sm:$0xf] %v115
    %120 = vst [vmem:[%s3 + $0x4] sm:$0xf] %v116
  $region21: #{transformer_forward.23} parent=0 // pred_fallthru
    _
  // Predicated region
  $region22: #{transformer_forward.23} parent=0 // pred_check
    _
  $region23: #{transformer_forward.23} parent=0 // pred_check_branch
    %122 = sbr.rel (0) target = $region25
  $region24: #{transformer_forward.23} parent=0 // pred_region
    _
  $region25: #{transformer_forward.23} parent=0 // pred_fallthru
    _
  // Predicated region
  $region26: #{transformer_forward.23} parent=0 // pred_check
    _
  $region27: #{transformer_forward.23} parent=0 // pred_check_branch
    %124 = sbr.rel (0) target = $region29
  $region28: #{transformer_forward.23} parent=0 // pred_region
    _
  $region29: #{transformer_forward.23} parent=0 // pred_fallthru
    _

// kernel: transformer_forward.24
$region0: #{transformer_forward.24}
  #allocation0 [shape = 'u32[]', space=smem, size = 0x4, offset = 0x4, fixed_abs, tag = 'smem constant byte address 0x4 - core index']
  #allocation1 [shape = 'u32[144,128]{1,0:T(1,128)}', space=vmem, size = 0x12000, scoped, tag = 'internal scratch']
  #allocation2 [shape = 'f32[16,32]{1,0:T(8,128)}', space=vmem, size = 0x2000, scoped, tag = 'scratch operand']
  %s0 = inlined_call_operand.vmem [shape: bf16[16,128], index: 0, kind: input, shape index: {}]
  %s1 = inlined_call_operand.vmem [shape: bf16[128,32], index: 1, kind: input, shape index: {}]
  %s2 = inlined_call_operand.vmem [shape: f32[1,32], index: 2, kind: input, shape index: {}]
  %s3 = inlined_call_operand.vmem [shape: f32[16,32], index: 3, kind: input, shape index: {}]
  %s4 = inlined_call_operand.vmem [shape: f32[16,32], index: 4, kind: output, shape index: {}]
  %s5 = sld [smem:[#allocation0]]
  $region34: #{transformer_forward.24} parent=0
    _
  %s7 = ssub.s32 1, %s5
  %s8 = scalar_select 0, %s7, %s5
  // Predicated region
  $region2: #{transformer_forward.24} parent=0 // pred_check
    _
  $region3: #{transformer_forward.24} parent=0 // pred_check_branch
    %10 = sbr.rel (0) target = $region5
  $region4: #{transformer_forward.24} parent=0 // pred_region
    _
  $region5: #{transformer_forward.24} parent=0 // pred_fallthru
    _
  // Predicated region
  $region6: #{transformer_forward.24} parent=0 // pred_check
    _
  $region7: #{transformer_forward.24} parent=0 // pred_check_branch
    %12 = sbr.rel (0) target = $region9
  $region8: #{transformer_forward.24} parent=0 // pred_region
    _
  $region9: #{transformer_forward.24} parent=0 // pred_fallthru
    _
  // Predicated region
  $region10: #{transformer_forward.24} parent=0 // pred_check
    _
  $region11: #{transformer_forward.24} parent=0 // pred_check_branch
    %14 = sbr.rel (0) target = $region13
  $region12: #{transformer_forward.24} parent=0 // pred_region
    _
  $region13: #{transformer_forward.24} parent=0 // pred_fallthru
    _
  // Predicated region
  $region14: #{transformer_forward.24} parent=0 // pred_check
    _
  $region15: #{transformer_forward.24} parent=0 // pred_check_branch
    %16 = sbr.rel (0) target = $region17
  $region16: #{transformer_forward.24} parent=0 // pred_region
    _
  $region17: #{transformer_forward.24} parent=0 // pred_fallthru
    _
  %p18 = scmp.eq.s32.totalorder 0, 0
  // Predicated region
  $region18: #{transformer_forward.24} parent=0 // pred_check
    %p19 = pneg %p18
  $region19: #{transformer_forward.24} parent=0 // pred_check_branch
    %21 = sbr.rel (%p19) target = $region21
  $region20: #{transformer_forward.24} parent=0 // pred_region
    %vm22 = vcmask 261120
    %23 = vst.msk [vmem:[#allocation2] sm:$0xff] %vm22, 0.0
    %24 = vst.msk [vmem:[#allocation2 + $0x8] sm:$0xff] %vm22, 0.0
  $region21: #{transformer_forward.24} parent=0 // pred_fallthru
    _
  %v25 = vld [vmem:[#allocation2] sm:$0xff]
  %v26 = vld [vmem:[#allocation2 + $0x8] sm:$0xff]
  %v27 = vld [vmem:[%s0] sm:$0xf]
  %v28 = vld [vmem:[%s0 + $0x4] sm:$0xf]
  %v29 = vld [vmem:[%s1] sm:$0xf]
  %v30 = vld [vmem:[%s1 + $0x4] sm:$0xf]
  %v31 = vld [vmem:[%s1 + $0x8] sm:$0xf]
  %v32 = vld [vmem:[%s1 + $0xc] sm:$0xf]
  %v33 = vld [vmem:[%s1 + $0x10] sm:$0xf]
  %v34 = vld [vmem:[%s1 + $0x14] sm:$0xf]
  %v35 = vld [vmem:[%s1 + $0x18] sm:$0xf]
  %v36 = vld [vmem:[%s1 + $0x1c] sm:$0xf]
  %v37 = vld [vmem:[%s1 + $0x20] sm:$0xf]
  %v38 = vld [vmem:[%s1 + $0x24] sm:$0xf]
  %v39 = vld [vmem:[%s1 + $0x28] sm:$0xf]
  %v40 = vld [vmem:[%s1 + $0x2c] sm:$0xf]
  %v41 = vld [vmem:[%s1 + $0x30] sm:$0xf]
  %v42 = vld [vmem:[%s1 + $0x34] sm:$0xf]
  %v43 = vld [vmem:[%s1 + $0x38] sm:$0xf]
  %v44 = vld [vmem:[%s1 + $0x3c] sm:$0xf]
  %v47 = vunpack.c.l.b16 %v27
  %v48 = vunpack.c.l.b16 %v28
  %v49 = vpack.c.b16 %v48, %v47
  %v67 = vunpack.c.l.b16 %v29
  %v68 = vunpack.c.l.b16 %v30
  %v69 = vunpack.c.l.b16 %v31
  %v70 = vunpack.c.l.b16 %v32
  %v71 = vunpack.c.l.b16 %v33
  %v72 = vunpack.c.l.b16 %v34
  %v73 = vunpack.c.l.b16 %v35
  %v74 = vunpack.c.l.b16 %v36
  %v75 = vunpack.c.l.b16 %v37
  %v76 = vunpack.c.l.b16 %v38
  %v77 = vunpack.c.l.b16 %v39
  %v78 = vunpack.c.l.b16 %v40
  %v79 = vunpack.c.l.b16 %v41
  %v80 = vunpack.c.l.b16 %v42
  %v81 = vunpack.c.l.b16 %v43
  %v82 = vunpack.c.l.b16 %v44
  %v83 = vpack.c.b16 %v68, %v67
  %v84 = vpack.c.b16 %v70, %v69
  %v85 = vpack.c.b16 %v72, %v71
  %v86 = vpack.c.b16 %v74, %v73
  %v87 = vpack.c.b16 %v76, %v75
  %v88 = vpack.c.b16 %v78, %v77
  %v89 = vpack.c.b16 %v80, %v79
  %v90 = vpack.c.b16 %v82, %v81
  %99 = vmatprep.subr.bf16.mxu0 0
  %100 = vmatpush1.bf16.msra.mxu0 %v83
  %101 = vmatprep.subr.bf16.mxu0 0
  %102 = vmatpush1.bf16.msra.mxu0 %v84
  %103 = vmatprep.subr.bf16.mxu0 0
  %104 = vmatpush1.bf16.msra.mxu0 %v85
  %105 = vmatprep.subr.bf16.mxu0 0
  %106 = vmatpush1.bf16.msra.mxu0 %v86
  %107 = vmatprep.subr.bf16.mxu0 0
  %108 = vmatpush1.bf16.msra.mxu0 %v87
  %109 = vmatprep.subr.bf16.mxu0 0
  %110 = vmatpush1.bf16.msra.mxu0 %v88
  %111 = vmatprep.subr.bf16.mxu0 0
  %112 = vmatpush1.bf16.msra.mxu0 %v89
  %113 = vmatprep.subr.bf16.mxu0 0
  %114 = vmatpush1.bf16.msra.mxu0 %v90
  %115 = vmatprep.subr.bf16.mxu0 0
  %116 = vmatpush1.bf16.msra.mxu0 0
  %117 = vmatprep.subr.bf16.mxu0 0
  %118 = vmatpush1.bf16.msra.mxu0 0
  %119 = vmatprep.subr.bf16.mxu0 0
  %120 = vmatpush1.bf16.msra.mxu0 0
  %121 = vmatprep.subr.bf16.mxu0 0
  %122 = vmatpush1.bf16.msra.mxu0 0
  %123 = vmatprep.subr.bf16.mxu0 0
  %124 = vmatpush1.bf16.msra.mxu0 0
  %125 = vmatprep.subr.bf16.mxu0 0
  %126 = vmatpush1.bf16.msra.mxu0 0
  %127 = vmatprep.subr.bf16.mxu0 0
  %128 = vmatpush1.bf16.msra.mxu0 0
  %129 = vmatprep.subr.bf16.mxu0 0
  %130 = vmatpush1.bf16.msra.mxu0 0
  %131 = vmatprep.mubr.bf16.mxu0 0
  %132 = vmatmul.mubr.bf16.gmra.mrb[0].mxu0 %v49
  %v133 = vpop.f32.mrb[0].mxu0
  %v134 = vadd.f32 0.0, %v133
  %v135 = vpop.f32.mrb[0].mxu0
  %v136 = vpop.f32.mrb[0].mxu0
  %v137 = vadd.f32 0.0, %v136
  %v138 = vpop.f32.mrb[0].mxu0
  %139 = vdwg.mxu0
  %v140 = vadd.f32 %v25, %v134
  %v141 = vadd.f32 %v26, %v137
  %vm142 = vcmask 261120
  %143 = vst.msk [vmem:[#allocation2] sm:$0xff] %vm142, %v140
  %144 = vst.msk [vmem:[#allocation2 + $0x8] sm:$0xff] %vm142, %v141
  // Predicated region
  $region22: #{transformer_forward.24} parent=0 // pred_check
    %p145 = pneg %p18
  $region23: #{transformer_forward.24} parent=0 // pred_check_branch
    %147 = sbr.rel (%p145) target = $region25
  $region24: #{transformer_forward.24} parent=0 // pred_region
    %v148 = vld [vmem:[#allocation2] sm:$0xff]
    %v149 = vld [vmem:[#allocation2 + $0x8] sm:$0xff]
    %v150 = vld [vmem:[%s2] sm:$0x1]
    %v152 = vlaneseq
    %v153 = vshrl.u32 %v152, 7
    %v154 = vsub.s32 0, %v153
    %v155 = vrot.slane %v150, %v154
    %v157 = vadd.f32 %v148, %v155
    %v158 = vadd.f32 %v149, %v155
    %v159 = vld [vmem:[%s3] sm:$0xff]
    %v160 = vld [vmem:[%s3 + $0x8] sm:$0xff]
    %v161 = vadd.f32 %v157, %v159
    %v162 = vadd.f32 %v158, %v160
    %163 = vst.msk [vmem:[%s4] sm:$0xff] %vm142, %v161
    %164 = vst.msk [vmem:[%s4 + $0x8] sm:$0xff] %vm142, %v162
  $region25: #{transformer_forward.24} parent=0 // pred_fallthru
    _
  // Predicated region
  $region26: #{transformer_forward.24} parent=0 // pred_check
    _
  $region27: #{transformer_forward.24} parent=0 // pred_check_branch
    %166 = sbr.rel (0) target = $region29
  $region28: #{transformer_forward.24} parent=0 // pred_region
    _
  $region29: #{transformer_forward.24} parent=0 // pred_fallthru
    _
  // Predicated region
  $region30: #{transformer_forward.24} parent=0 // pred_check
    _
  $region31: #{transformer_forward.24} parent=0 // pred_check_branch
    %168 = sbr.rel (0) target = $region33
  $region32: #{transformer_forward.24} parent=0 // pred_region
    _
  $region33: #{transformer_forward.24} parent=0 // pred_fallthru
    _

// kernel: transformer_forward.33
$region0: #{transformer_forward.33}
  #allocation0 [shape = 'u32[]', space=smem, size = 0x4, offset = 0x4, fixed_abs, tag = 'smem constant byte address 0x4 - core index']
  #allocation1 [shape = 'u32[144,128]{1,0:T(1,128)}', space=vmem, size = 0x12000, scoped, tag = 'internal scratch']
  #allocation2 [shape = 'f32[16,16]{1,0:T(8,128)}', space=vmem, size = 0x2000, scoped, tag = 'scratch operand']
  %s0 = inlined_call_operand.vmem [shape: bf16[16,32], index: 0, kind: input, shape index: {}]
  %s1 = inlined_call_operand.vmem [shape: bf16[32,16], index: 1, kind: input, shape index: {}]
  %s2 = inlined_call_operand.vmem [shape: f32[1,16], index: 2, kind: input, shape index: {}]
  %s3 = inlined_call_operand.hbm [shape: f32[16,16], index: 3, kind: output, shape index: {}]
  %s4 = sld [smem:[#allocation0]]
  $region30: #{transformer_forward.33} parent=0
    _
  %s6 = ssub.s32 1, %s4
  %s7 = scalar_select 0, %s6, %s4
  $region1: #{transformer_forward.33} parent=0
    #allocation3 [shape = 'u8[8192]{0}', space=vmem, size = 0x2000, scoped, tag = 'output window, operand 0, single buffered']
    #allocation4 [shape = 's32[1]{0}', space=sflag, size = 0x4, scoped, tag = 'scoped memory for transformer_forward.33']
    %8 = vsyncpa [#allocation4], 0
    // Predicated region
    $region2: #{transformer_forward.33} parent=1 // pred_check
      _
    $region3: #{transformer_forward.33} parent=1 // pred_check_branch
      %10 = sbr.rel (0) target = $region5
    $region4: #{transformer_forward.33} parent=1 // pred_region
      _
    $region5: #{transformer_forward.33} parent=1 // pred_fallthru
      _
    // Predicated region
    $region6: #{transformer_forward.33} parent=1 // pred_check
      _
    $region7: #{transformer_forward.33} parent=1 // pred_check_branch
      %12 = sbr.rel (0) target = $region9
    $region8: #{transformer_forward.33} parent=1 // pred_region
      _
    $region9: #{transformer_forward.33} parent=1 // pred_fallthru
      _
    // Predicated region
    $region10: #{transformer_forward.33} parent=1 // pred_check
      _
    $region11: #{transformer_forward.33} parent=1 // pred_check_branch
      %14 = sbr.rel (0) target = $region13
    $region12: #{transformer_forward.33} parent=1 // pred_region
      _
    $region13: #{transformer_forward.33} parent=1 // pred_fallthru
      _
    %p16 = scmp.eq.s32.totalorder 0, 0
    // Predicated region
    $region14: #{transformer_forward.33} parent=1 // pred_check
      %p17 = pneg %p16
    $region15: #{transformer_forward.33} parent=1 // pred_check_branch
      %19 = sbr.rel (%p17) target = $region17
    $region16: #{transformer_forward.33} parent=1 // pred_region
      %vm20 = vcmask 130048
      %21 = vst.msk [vmem:[#allocation2] sm:$0xff] %vm20, 0.0
      %22 = vst.msk [vmem:[#allocation2 + $0x8] sm:$0xff] %vm20, 0.0
    $region17: #{transformer_forward.33} parent=1 // pred_fallthru
      _
    %v23 = vld [vmem:[#allocation2] sm:$0xff]
    %v24 = vld [vmem:[#allocation2 + $0x8] sm:$0xff]
    %v25 = vld [vmem:[%s0] sm:$0xf]
    %v26 = vld [vmem:[%s0 + $0x4] sm:$0xf]
    %v27 = vld [vmem:[%s1] sm:$0xf]
    %v28 = vld [vmem:[%s1 + $0x4] sm:$0xf]
    %v29 = vld [vmem:[%s1 + $0x8] sm:$0xf]
    %v30 = vld [vmem:[%s1 + $0xc] sm:$0xf]
    %v33 = vunpack.c.l.b16 %v25
    %v34 = vunpack.c.l.b16 %v26
    %v35 = vpack.c.b16 %v34, %v33
    %v40 = vunpack.c.l.b16 %v27
    %v41 = vunpack.c.l.b16 %v28
    %v42 = vunpack.c.l.b16 %v29
    %v43 = vunpack.c.l.b16 %v30
    %v44 = vpack.c.b16 %v41, %v40
    %v45 = vpack.c.b16 %v43, %v42
    %vm48 = vcmask 261120
    %v50 = vsel %vm48, %v35, 0
    %52 = vmatprep.subr.bf16.mxu0 0
    %53 = vmatpush1.bf16.msra.mxu0 %v44
    %54 = vmatprep.subr.bf16.mxu0 0
    %55 = vmatpush1.bf16.msra.mxu0 %v45
    %56 = vmatprep.subr.bf16.mxu0 0
    %57 = vmatpush1.bf16.msra.mxu0 0
    %58 = vmatprep.subr.bf16.mxu0 0
    %59 = vmatpush1.bf16.msra.mxu0 0
    %60 = vmatprep.subr.bf16.mxu0 0
    %61 = vmatpush1.bf16.msra.mxu0 0
    %62 = vmatprep.subr.bf16.mxu0 0
    %63 = vmatpush1.bf16.msra.mxu0 0
    %64 = vmatprep.subr.bf16.mxu0 0
    %65 = vmatpush1.bf16.msra.mxu0 0
    %66 = vmatprep.subr.bf16.mxu0 0
    %67 = vmatpush1.bf16.msra.mxu0 0
    %68 = vmatprep.subr.bf16.mxu0 0
    %69 = vmatpush1.bf16.msra.mxu0 0
    %70 = vmatprep.subr.bf16.mxu0 0
    %71 = vmatpush1.bf16.msra.mxu0 0
    %72 = vmatprep.subr.bf16.mxu0 0
    %73 = vmatpush1.bf16.msra.mxu0 0
    %74 = vmatprep.subr.bf16.mxu0 0
    %75 = vmatpush1.bf16.msra.mxu0 0
    %76 = vmatprep.subr.bf16.mxu0 0
    %77 = vmatpush1.bf16.msra.mxu0 0
    %78 = vmatprep.subr.bf16.mxu0 0
    %79 = vmatpush1.bf16.msra.mxu0 0
    %80 = vmatprep.subr.bf16.mxu0 0
    %81 = vmatpush1.bf16.msra.mxu0 0
    %82 = vmatprep.subr.bf16.mxu0 0
    %83 = vmatpush1.bf16.msra.mxu0 0
    %84 = vmatprep.mubr.bf16.mxu0 0
    %85 = vmatmul.mubr.bf16.gmra.mrb[0].mxu0 %v50
    %v86 = vpop.f32.mrb[0].mxu0
    %v87 = vadd.f32 0.0, %v86
    %v88 = vpop.f32.mrb[0].mxu0
    %v89 = vpop.f32.mrb[0].mxu0
    %v90 = vadd.f32 0.0, %v89
    %v91 = vpop.f32.mrb[0].mxu0
    %92 = vdwg.mxu0
    %v93 = vadd.f32 %v23, %v87
    %v94 = vadd.f32 %v24, %v90
    %vm95 = vcmask 130048
    %96 = vst.msk [vmem:[#allocation2] sm:$0xff] %vm95, %v93
    %97 = vst.msk [vmem:[#allocation2 + $0x8] sm:$0xff] %vm95, %v94
    // Predicated region
    $region18: #{transformer_forward.33} parent=1 // pred_check
      %p98 = pneg %p16
    $region19: #{transformer_forward.33} parent=1 // pred_check_branch
      %100 = sbr.rel (%p98) target = $region21
    $region20: #{transformer_forward.33} parent=1 // pred_region
      %v101 = vld [vmem:[#allocation2] sm:$0xff]
      %v102 = vld [vmem:[#allocation2 + $0x8] sm:$0xff]
      %v103 = vld [vmem:[%s2] sm:$0x1]
      %v105 = vlaneseq
      %v106 = vshrl.u32 %v105, 7
      %v107 = vsub.s32 0, %v106
      %v108 = vrot.slane %v103, %v107
      %v110 = vadd.f32 %v101, %v108
      %v111 = vadd.f32 %v102, %v108
      %112 = vst.msk [vmem:[#allocation3] sm:$0xff] %vm95, %v110
      %113 = vst.msk [vmem:[#allocation3 + $0x8] sm:$0xff] %vm95, %v111
    $region21: #{transformer_forward.33} parent=1 // pred_fallthru
      _
    // Predicated region
    $region22: #{transformer_forward.33} parent=1 // pred_check
      _
    $region23: #{transformer_forward.33} parent=1 // pred_check_branch
      %115 = sbr.rel (0) target = $region25
    $region24: #{transformer_forward.33} parent=1 // pred_region
      %s117 = ssub.s32 256, 256
      %118 = vsyncadd [#allocation4], %s117
      %s119 = sshll.u32 [#allocation3], 4
      %s120 = int_to_ptr.vmem [resolvable:$true] %s119
      %125 = dma.vmem_to_hbm [thread:$0]  %s120, 256, %s3, [#allocation4], 128, 128, 8
    $region25: #{transformer_forward.33} parent=1 // pred_fallthru
      _
    // Predicated region
    $region26: #{transformer_forward.33} parent=1 // pred_check
      _
    $region27: #{transformer_forward.33} parent=1 // pred_check_branch
      %127 = sbr.rel (0) target = $region29
    $region28: #{transformer_forward.33} parent=1 // pred_region
      %128 = dma.done [#allocation4], 256
    $region29: #{transformer_forward.33} parent=1 // pred_fallthru
      _
    %129 = vsyncpa [#allocation4], 1

</llo_original>
